<compile_context>
chip_gen: v7x
topology: tpu7x:2x2x1
jax: 0.10.0
libtpu: 0.0.40
codegen_flags: <defaults>
</compile_context>

<pallas_src>
import numpy as np
import jax
import jax.numpy as jnp
from jax import lax
from jax.experimental import pallas as pl
from jax.experimental.pallas import tpu as pltpu


# ---------------------------------------------------------------------------
# SRM filter bank (fixed, non-learnable) — identical values to the PyTorch code.
# ---------------------------------------------------------------------------
def _srm_filters():
    f1 = np.array([[0, 0, 0, 0, 0],
                   [0, -1, 2, -1, 0],
                   [0, 2, -4, 2, 0],
                   [0, -1, 2, -1, 0],
                   [0, 0, 0, 0, 0]], dtype=np.float32) / 4.0
    f2 = np.array([[-1, 2, -2, 2, -1],
                   [2, -6, 8, -6, 2],
                   [-2, 8, -12, 8, -2],
                   [2, -6, 8, -6, 2],
                   [-1, 2, -2, 2, -1]], dtype=np.float32) / 12.0
    f3 = np.array([[0, 0, 0, 0, 0],
                   [0, 0, 0, 0, 0],
                   [0, 1, -2, 1, 0],
                   [0, 0, 0, 0, 0],
                   [0, 0, 0, 0, 0]], dtype=np.float32) / 2.0
    return np.stack([f1, f2, f3], axis=0)  # (3, 5, 5)


def build_srm_kernel_nchw(inc):
    # Matches torch: np.repeat([[f1],[f2],[f3]], inc, axis=0) -> (3*inc, 1, 5, 5)
    filts = _srm_filters()[:, None, :, :]
    return np.repeat(filts, inc, axis=0)


def _round_up(x, m):
    return ((x + m - 1) // m) * m


# ---------------------------------------------------------------------------
# Fused Pallas kernel: one (batch, TH-row strip) per grid step.
# ---------------------------------------------------------------------------
def _make_kernel(inc, outc, TH, TW, n_wtiles, n_pairs, by_channel):
    # Shared / separable horizontal passes for the three SRM filters:
    #   f1 = -outer(U, U) (separable 3x3);  f3 = U applied horizontally at dy=2;
    #   f2 is vertically symmetric -> only 3 distinct horizontal 5-tap rows.
    U  = (0.5, -1.0, 0.5)
    A  = (-1.0 / 12, 2.0 / 12, -2.0 / 12, 2.0 / 12, -1.0 / 12)    # f2 rows 0 & 4
    Bv = (2.0 / 12, -6.0 / 12, 8.0 / 12, -6.0 / 12, 2.0 / 12)     # f2 rows 1 & 3
    Cv = (-2.0 / 12, 8.0 / 12, -12.0 / 12, 8.0 / 12, -2.0 / 12)   # f2 row 2

    def kernel(x_ref, w_ref, b_ref, o_ref):
        # x_ref : (1, inc, 1, TH+4, W_pad+4) VMEM — halo'd input strip (one batch)
        # w_ref : (outc * n_pairs,)          SMEM — BN-scale-folded 1x1 weights
        # b_ref : (outc,)                    SMEM — folded BatchNorm bias
        # o_ref : (1, outc, TH, W_pad)       VMEM — output strip (W lane-dense)

        # Hoist every SMEM scalar read out of the unrolled FMA loops.
        wv = [[w_ref[oc * n_pairs + p] for p in range(n_pairs)] for oc in range(outc)]
        bv = [b_ref[oc] for oc in range(outc)]

        for wt in range(n_wtiles):                 # static lane tiling (TW columns)
            col0 = wt * TW
            # Bias folded into the accumulator init (ReLU fused at the store).
            acc = [jnp.full((TH, TW), bv[oc], jnp.float32) for oc in range(outc)]

            for c in sorted(by_channel):
                flist = by_channel[c]              # [(srm_filter_idx, pair_idx), ...]
                fset = {f for f, _ in flist}
                need_u = (0 in fset) or (2 in fset)
                need_2 = 1 in fset

                # One pass over the 5 lane shifts: each shifted slab is loaded
                # once and consumed by every horizontal filter that needs it
                # (keeps only a single (TH+4, TW) shifted slab live at a time).
                hu = ha = hb = hc = None
                for dx in range(5):
                    if not need_2 and (dx == 0 or dx == 4):
                        continue
                    xd = x_ref[0, c, 0, :, col0 + dx:col0 + dx + TW].astype(jnp.float32)
                    if need_2:
                        ha = xd * A[dx] if ha is None else ha + xd * A[dx]
                        hb = xd * Bv[dx] if hb is None else hb + xd * Bv[dx]
                        hc = xd * Cv[dx] if hc is None else hc + xd * Cv[dx]
                    if need_u and 1 <= dx <= 3:
                        t = xd * U[dx - 1]
                        hu = t if hu is None else hu + t

                # Cheap vertical combines (sublane-offset slices of the h-passes).
                res = {}
                if need_u:
                    hu_mid = hu[2:2 + TH, :]
                    if 0 in fset:                  # f1 = -outer(U, U)
                        res[0] = hu_mid - 0.5 * (hu[1:1 + TH, :] + hu[3:3 + TH, :])
                    if 2 in fset:                  # f3 = horizontal U at dy=2
                        res[2] = hu_mid
                if need_2:                         # f2: symmetric rows A,B,C,B,A
                    res[1] = (ha[0:TH, :] + ha[4:4 + TH, :]
                              + hb[1:1 + TH, :] + hb[3:3 + TH, :]
                              + hc[2:2 + TH, :])

                for f, p in flist:
                    r = jnp.clip(res[f], -3.0, 3.0)            # Hardtanh(-3, 3)
                    for oc in range(outc):                     # folded 1x1 (+BN scale)
                        acc[oc] = acc[oc] + r * wv[oc][p]

            for oc in range(outc):                             # ReLU + store
                o_ref[0, oc, :, col0:col0 + TW] = jnp.maximum(
                    acc[oc], 0.0).astype(o_ref.dtype)

    return kernel


def srm_conv2d_separate(x, w1, bn_scale, bn_bias, inc, outc):
    """x: (B, inc, H, W). Returns (B, outc, H, W)."""
    B, C, H, W = x.shape
    assert C == inc
    C3 = 3 * inc

    # Grouped-conv output channel k applies SRM filter (k // inc) to input
    # channel (k // 3) — faithful to the PyTorch module (including its inc != 3
    # quirk).  Collect the distinct (filter, channel) pairs.
    pairs = []
    for k in range(C3):
        pr = (k // inc, k // 3)
        if pr not in pairs:
            pairs.append(pr)
    n_pairs = len(pairs)

    # Fold duplicate grouped-conv channels (identical residual maps) and the
    # BatchNorm scale into the 1x1 weights (exact).
    fold = np.zeros((C3, n_pairs), np.float32)
    for k in range(C3):
        fold[k, pairs.index((k // inc, k // 3))] = 1.0
    w1_flat = jnp.asarray(w1).reshape(outc, C3).astype(jnp.float32)
    w_eff = (w1_flat @ jnp.asarray(fold)) * bn_scale.reshape(outc, 1).astype(jnp.float32)
    w_eff_flat = w_eff.reshape(-1)                              # (outc * n_pairs,)
    bias = bn_bias.reshape(outc).astype(jnp.float32)            # (outc,)

    by_channel = {}
    for p, (f, c) in enumerate(pairs):
        by_channel.setdefault(c, []).append((f, p))

    # ---- tiling: TH-row strips (sublanes), lane axis = W (tiled in-kernel) ----
    TH = min(32, _round_up(H, 8))
    H_pad = _round_up(H, TH)
    n_strips = H_pad // TH
    if W >= 128:
        TW = 128
        W_pad = _round_up(W, TW)
    else:
        TW = W
        W_pad = W
    n_wtiles = W_pad // TW

    # Halo pad + overlapping-strip gather so each grid step DMAs only its own
    # (TH+4)-row window (auto double-buffered / prefetched by the pipeline).
    xp = jnp.pad(x, ((0, 0), (0, 0), (2, H_pad - H + 2), (2, W_pad - W + 2)))
    if n_strips == 1:
        x_strips = xp[:, :, None, :, :]
    else:
        row_idx = (np.arange(n_strips, dtype=np.int32)[:, None] * TH
                   + np.arange(TH + 4, dtype=np.int32)[None, :])
        x_strips = xp[:, :, row_idx, :]       # (B, inc, n_strips, TH+4, W_pad+4)

    kernel = _make_kernel(inc, outc, TH, TW, n_wtiles, n_pairs, by_channel)

    itemsize = np.dtype(x.dtype).itemsize
    in_block = inc * (TH + 4) * (W_pad + 4) * itemsize
    out_block = outc * TH * W_pad * itemsize
    vmem_limit = int(min(max(2 * (in_block + out_block) + (16 << 20), 24 << 20),
                         56 << 20))

    out = pl.pallas_call(
        kernel,
        out_shape=jax.ShapeDtypeStruct((B, outc, H_pad, W_pad), x.dtype),
        grid_spec=pltpu.PrefetchScalarGridSpec(
            num_scalar_prefetch=0,
            grid=(B, n_strips),
            in_specs=[
                # Only the strip + halo is resident per step (windowed along H).
                pl.BlockSpec((1, inc, 1, TH + 4, W_pad + 4),
                             lambda b, h: (b, 0, h, 0, 0)),
                pl.BlockSpec(memory_space=pltpu.MemorySpace.SMEM),   # w_eff_flat
                pl.BlockSpec(memory_space=pltpu.MemorySpace.SMEM),   # bias
            ],
            out_specs=pl.BlockSpec((1, outc, TH, W_pad), lambda b, h: (b, 0, h, 0)),
        ),
        compiler_params=pltpu.CompilerParams(
            dimension_semantics=("parallel", "parallel"),
            vmem_limit_bytes=vmem_limit),
    )(x_strips, w_eff_flat, bias)

    if H_pad != H or W_pad != W:
        out = out[:, :, :H, :W]
    return out                                                    # (B, outc, H, W)


if __name__ == "__main__":
    inc, outc = 4, 8
    B, H, W = 2, 16, 16

    key = jax.random.PRNGKey(0)
    kx, kw = jax.random.split(key)
    x = jax.random.normal(kx, (B, inc, H, W), jnp.float32)

    # 1x1 conv weights: kaiming_normal_(a=1) => std = sqrt(1 / fan_in), fan_in = 3*inc
    fan_in = 3 * inc
    w1 = jax.random.normal(kw, (outc, 3 * inc, 1, 1), jnp.float32) * np.sqrt(1.0 / fan_in)

    # BatchNorm2d params of a fresh module (inference mode).
    eps = 1e-5
    gamma = jnp.ones((outc,), jnp.float32)
    beta = jnp.zeros((outc,), jnp.float32)
    r_mean = jnp.zeros((outc,), jnp.float32)
    r_var = jnp.ones((outc,), jnp.float32)
    bn_scale = gamma / jnp.sqrt(r_var + eps)
    bn_bias = beta - r_mean * bn_scale

    out = srm_conv2d_separate(x, w1, bn_scale, bn_bias, inc, outc)
    out = jax.block_until_ready(out)

    # Pure-JAX reference (lax.conv) matching the PyTorch module:
    # grouped conv + hardtanh + 1x1 conv + BN(eval) + ReLU.
    k_srm = jnp.asarray(build_srm_kernel_nchw(inc))
    ref = lax.conv_general_dilated(
        x, k_srm, (1, 1), ((2, 2), (2, 2)),
        feature_group_count=inc,
        dimension_numbers=("NCHW", "OIHW", "NCHW"),
        precision=lax.Precision.HIGHEST)
    ref = jnp.clip(ref, -3.0, 3.0)
    ref = lax.conv_general_dilated(
        ref, w1, (1, 1), ((0, 0), (0, 0)),
        dimension_numbers=("NCHW", "OIHW", "NCHW"),
        precision=lax.Precision.HIGHEST)
    ref = ref * bn_scale[None, :, None, None] + bn_bias[None, :, None, None]
    ref = jnp.maximum(ref, 0.0)

    np.testing.assert_allclose(np.asarray(out), np.asarray(ref), atol=2e-3, rtol=2e-3)
    print("KERNEL_OK")
</pallas_src>

<mosaic_0001>
module attributes {stable_mosaic.version = 11 : i64} {
  func.func @kernel(%arg0: i32, %arg1: i32, %arg2: memref<1x4x1x20x20xf32, #tpu.memory_space<vmem>>, %arg3: memref<48xf32, #tpu.memory_space<smem>>, %arg4: memref<8xf32, #tpu.memory_space<smem>>, %arg5: memref<1x8x16x16xf32, #tpu.memory_space<vmem>>) attributes {dimension_semantics = [#tpu.dimension_semantics<parallel>, #tpu.dimension_semantics<parallel>], iteration_bounds = array<i64: 2, 1>, scalar_prefetch = 0 : i64, scratch_operands = 0 : i64, tpu.core_type = #tpu.core_type<tc>, window_params = [{transform_indices = @transform_0, window_bounds = array<i64: 1, 4, 1, 20, 20>}, {transform_indices = @transform_1, window_bounds = array<i64: 48>}, {transform_indices = @transform_2, window_bounds = array<i64: 8>}, {transform_indices = @transform_3, window_bounds = array<i64: 1, 8, 16, 16>}]} {
    %c0 = arith.constant 0 : index
    %0 = memref.load %arg3[%c0] : memref<48xf32, #tpu.memory_space<smem>>
    %c1 = arith.constant 1 : index
    %1 = memref.load %arg3[%c1] : memref<48xf32, #tpu.memory_space<smem>>
    %c2 = arith.constant 2 : index
    %2 = memref.load %arg3[%c2] : memref<48xf32, #tpu.memory_space<smem>>
    %c3 = arith.constant 3 : index
    %3 = memref.load %arg3[%c3] : memref<48xf32, #tpu.memory_space<smem>>
    %c4 = arith.constant 4 : index
    %4 = memref.load %arg3[%c4] : memref<48xf32, #tpu.memory_space<smem>>
    %c5 = arith.constant 5 : index
    %5 = memref.load %arg3[%c5] : memref<48xf32, #tpu.memory_space<smem>>
    %c6 = arith.constant 6 : index
    %6 = memref.load %arg3[%c6] : memref<48xf32, #tpu.memory_space<smem>>
    %c7 = arith.constant 7 : index
    %7 = memref.load %arg3[%c7] : memref<48xf32, #tpu.memory_space<smem>>
    %c8 = arith.constant 8 : index
    %8 = memref.load %arg3[%c8] : memref<48xf32, #tpu.memory_space<smem>>
    %c9 = arith.constant 9 : index
    %9 = memref.load %arg3[%c9] : memref<48xf32, #tpu.memory_space<smem>>
    %c10 = arith.constant 10 : index
    %10 = memref.load %arg3[%c10] : memref<48xf32, #tpu.memory_space<smem>>
    %c11 = arith.constant 11 : index
    %11 = memref.load %arg3[%c11] : memref<48xf32, #tpu.memory_space<smem>>
    %c12 = arith.constant 12 : index
    %12 = memref.load %arg3[%c12] : memref<48xf32, #tpu.memory_space<smem>>
    %c13 = arith.constant 13 : index
    %13 = memref.load %arg3[%c13] : memref<48xf32, #tpu.memory_space<smem>>
    %c14 = arith.constant 14 : index
    %14 = memref.load %arg3[%c14] : memref<48xf32, #tpu.memory_space<smem>>
    %c15 = arith.constant 15 : index
    %15 = memref.load %arg3[%c15] : memref<48xf32, #tpu.memory_space<smem>>
    %c16 = arith.constant 16 : index
    %16 = memref.load %arg3[%c16] : memref<48xf32, #tpu.memory_space<smem>>
    %c17 = arith.constant 17 : index
    %17 = memref.load %arg3[%c17] : memref<48xf32, #tpu.memory_space<smem>>
    %c18 = arith.constant 18 : index
    %18 = memref.load %arg3[%c18] : memref<48xf32, #tpu.memory_space<smem>>
    %c19 = arith.constant 19 : index
    %19 = memref.load %arg3[%c19] : memref<48xf32, #tpu.memory_space<smem>>
    %c20 = arith.constant 20 : index
    %20 = memref.load %arg3[%c20] : memref<48xf32, #tpu.memory_space<smem>>
    %c21 = arith.constant 21 : index
    %21 = memref.load %arg3[%c21] : memref<48xf32, #tpu.memory_space<smem>>
    %c22 = arith.constant 22 : index
    %22 = memref.load %arg3[%c22] : memref<48xf32, #tpu.memory_space<smem>>
    %c23 = arith.constant 23 : index
    %23 = memref.load %arg3[%c23] : memref<48xf32, #tpu.memory_space<smem>>
    %c24 = arith.constant 24 : index
    %24 = memref.load %arg3[%c24] : memref<48xf32, #tpu.memory_space<smem>>
    %c25 = arith.constant 25 : index
    %25 = memref.load %arg3[%c25] : memref<48xf32, #tpu.memory_space<smem>>
    %c26 = arith.constant 26 : index
    %26 = memref.load %arg3[%c26] : memref<48xf32, #tpu.memory_space<smem>>
    %c27 = arith.constant 27 : index
    %27 = memref.load %arg3[%c27] : memref<48xf32, #tpu.memory_space<smem>>
    %c28 = arith.constant 28 : index
    %28 = memref.load %arg3[%c28] : memref<48xf32, #tpu.memory_space<smem>>
    %c29 = arith.constant 29 : index
    %29 = memref.load %arg3[%c29] : memref<48xf32, #tpu.memory_space<smem>>
    %c30 = arith.constant 30 : index
    %30 = memref.load %arg3[%c30] : memref<48xf32, #tpu.memory_space<smem>>
    %c31 = arith.constant 31 : index
    %31 = memref.load %arg3[%c31] : memref<48xf32, #tpu.memory_space<smem>>
    %c32 = arith.constant 32 : index
    %32 = memref.load %arg3[%c32] : memref<48xf32, #tpu.memory_space<smem>>
    %c33 = arith.constant 33 : index
    %33 = memref.load %arg3[%c33] : memref<48xf32, #tpu.memory_space<smem>>
    %c34 = arith.constant 34 : index
    %34 = memref.load %arg3[%c34] : memref<48xf32, #tpu.memory_space<smem>>
    %c35 = arith.constant 35 : index
    %35 = memref.load %arg3[%c35] : memref<48xf32, #tpu.memory_space<smem>>
    %c36 = arith.constant 36 : index
    %36 = memref.load %arg3[%c36] : memref<48xf32, #tpu.memory_space<smem>>
    %c37 = arith.constant 37 : index
    %37 = memref.load %arg3[%c37] : memref<48xf32, #tpu.memory_space<smem>>
    %c38 = arith.constant 38 : index
    %38 = memref.load %arg3[%c38] : memref<48xf32, #tpu.memory_space<smem>>
    %c39 = arith.constant 39 : index
    %39 = memref.load %arg3[%c39] : memref<48xf32, #tpu.memory_space<smem>>
    %c40 = arith.constant 40 : index
    %40 = memref.load %arg3[%c40] : memref<48xf32, #tpu.memory_space<smem>>
    %c41 = arith.constant 41 : index
    %41 = memref.load %arg3[%c41] : memref<48xf32, #tpu.memory_space<smem>>
    %c42 = arith.constant 42 : index
    %42 = memref.load %arg3[%c42] : memref<48xf32, #tpu.memory_space<smem>>
    %c43 = arith.constant 43 : index
    %43 = memref.load %arg3[%c43] : memref<48xf32, #tpu.memory_space<smem>>
    %c44 = arith.constant 44 : index
    %44 = memref.load %arg3[%c44] : memref<48xf32, #tpu.memory_space<smem>>
    %c45 = arith.constant 45 : index
    %45 = memref.load %arg3[%c45] : memref<48xf32, #tpu.memory_space<smem>>
    %c46 = arith.constant 46 : index
    %46 = memref.load %arg3[%c46] : memref<48xf32, #tpu.memory_space<smem>>
    %c47 = arith.constant 47 : index
    %47 = memref.load %arg3[%c47] : memref<48xf32, #tpu.memory_space<smem>>
    %c0_0 = arith.constant 0 : index
    %48 = memref.load %arg4[%c0_0] : memref<8xf32, #tpu.memory_space<smem>>
    %c1_1 = arith.constant 1 : index
    %49 = memref.load %arg4[%c1_1] : memref<8xf32, #tpu.memory_space<smem>>
    %c2_2 = arith.constant 2 : index
    %50 = memref.load %arg4[%c2_2] : memref<8xf32, #tpu.memory_space<smem>>
    %c3_3 = arith.constant 3 : index
    %51 = memref.load %arg4[%c3_3] : memref<8xf32, #tpu.memory_space<smem>>
    %c4_4 = arith.constant 4 : index
    %52 = memref.load %arg4[%c4_4] : memref<8xf32, #tpu.memory_space<smem>>
    %c5_5 = arith.constant 5 : index
    %53 = memref.load %arg4[%c5_5] : memref<8xf32, #tpu.memory_space<smem>>
    %c6_6 = arith.constant 6 : index
    %54 = memref.load %arg4[%c6_6] : memref<8xf32, #tpu.memory_space<smem>>
    %c7_7 = arith.constant 7 : index
    %55 = memref.load %arg4[%c7_7] : memref<8xf32, #tpu.memory_space<smem>>
    %56 = vector.broadcast %48 : f32 to vector<16x16xf32>
    %57 = vector.broadcast %49 : f32 to vector<16x16xf32>
    %58 = vector.broadcast %50 : f32 to vector<16x16xf32>
    %59 = vector.broadcast %51 : f32 to vector<16x16xf32>
    %60 = vector.broadcast %52 : f32 to vector<16x16xf32>
    %61 = vector.broadcast %53 : f32 to vector<16x16xf32>
    %62 = vector.broadcast %54 : f32 to vector<16x16xf32>
    %63 = vector.broadcast %55 : f32 to vector<16x16xf32>
    %c0_8 = arith.constant 0 : index
    %c0_9 = arith.constant 0 : index
    %c0_10 = arith.constant 0 : index
    %c0_11 = arith.constant 0 : index
    %c1_12 = arith.constant 1 : index
    %64 = vector.load %arg2[%c0_8, %c0_9, %c0_10, %c0_11, %c1_12] : memref<1x4x1x20x20xf32, #tpu.memory_space<vmem>>, vector<1x1x1x20x16xf32>
    %65 = vector.shape_cast %64 : vector<1x1x1x20x16xf32> to vector<20x16xf32>
    %cst = arith.constant 5.000000e-01 : f32
    %66 = vector.broadcast %cst : f32 to vector<20x16xf32>
    %67 = arith.mulf %65, %66 : vector<20x16xf32>
    %c0_13 = arith.constant 0 : index
    %c0_14 = arith.constant 0 : index
    %c0_15 = arith.constant 0 : index
    %c0_16 = arith.constant 0 : index
    %c2_17 = arith.constant 2 : index
    %68 = vector.load %arg2[%c0_13, %c0_14, %c0_15, %c0_16, %c2_17] : memref<1x4x1x20x20xf32, #tpu.memory_space<vmem>>, vector<1x1x1x20x16xf32>
    %69 = vector.shape_cast %68 : vector<1x1x1x20x16xf32> to vector<20x16xf32>
    %cst_18 = arith.constant -1.000000e+00 : f32
    %70 = vector.broadcast %cst_18 : f32 to vector<20x16xf32>
    %71 = arith.mulf %69, %70 : vector<20x16xf32>
    %72 = arith.addf %67, %71 : vector<20x16xf32>
    %c0_19 = arith.constant 0 : index
    %c0_20 = arith.constant 0 : index
    %c0_21 = arith.constant 0 : index
    %c0_22 = arith.constant 0 : index
    %c3_23 = arith.constant 3 : index
    %73 = vector.load %arg2[%c0_19, %c0_20, %c0_21, %c0_22, %c3_23] : memref<1x4x1x20x20xf32, #tpu.memory_space<vmem>>, vector<1x1x1x20x16xf32>
    %74 = vector.shape_cast %73 : vector<1x1x1x20x16xf32> to vector<20x16xf32>
    %cst_24 = arith.constant 5.000000e-01 : f32
    %75 = vector.broadcast %cst_24 : f32 to vector<20x16xf32>
    %76 = arith.mulf %74, %75 : vector<20x16xf32>
    %77 = arith.addf %72, %76 : vector<20x16xf32>
    %78 = vector.extract_strided_slice %77 {offsets = [2, 0], sizes = [16, 16], strides = [1, 1]} : vector<20x16xf32> to vector<16x16xf32>
    %79 = vector.extract_strided_slice %77 {offsets = [1, 0], sizes = [16, 16], strides = [1, 1]} : vector<20x16xf32> to vector<16x16xf32>
    %80 = vector.extract_strided_slice %77 {offsets = [3, 0], sizes = [16, 16], strides = [1, 1]} : vector<20x16xf32> to vector<16x16xf32>
    %81 = arith.addf %79, %80 : vector<16x16xf32>
    %cst_25 = arith.constant 5.000000e-01 : f32
    %82 = vector.broadcast %cst_25 : f32 to vector<16x16xf32>
    %83 = arith.mulf %82, %81 : vector<16x16xf32>
    %84 = arith.subf %78, %83 : vector<16x16xf32>
    %cst_26 = arith.constant -3.000000e+00 : f32
    %cst_27 = arith.constant 3.000000e+00 : f32
    %85 = vector.broadcast %cst_26 : f32 to vector<16x16xf32>
    %86 = arith.maximumf %85, %84 : vector<16x16xf32>
    %87 = vector.broadcast %cst_27 : f32 to vector<16x16xf32>
    %88 = arith.minimumf %87, %86 : vector<16x16xf32>
    %89 = vector.broadcast %0 : f32 to vector<16x16xf32>
    %90 = arith.mulf %88, %89 : vector<16x16xf32>
    %91 = arith.addf %56, %90 : vector<16x16xf32>
    %92 = vector.broadcast %6 : f32 to vector<16x16xf32>
    %93 = arith.mulf %88, %92 : vector<16x16xf32>
    %94 = arith.addf %57, %93 : vector<16x16xf32>
    %95 = vector.broadcast %12 : f32 to vector<16x16xf32>
    %96 = arith.mulf %88, %95 : vector<16x16xf32>
    %97 = arith.addf %58, %96 : vector<16x16xf32>
    %98 = vector.broadcast %18 : f32 to vector<16x16xf32>
    %99 = arith.mulf %88, %98 : vector<16x16xf32>
    %100 = arith.addf %59, %99 : vector<16x16xf32>
    %101 = vector.broadcast %24 : f32 to vector<16x16xf32>
    %102 = arith.mulf %88, %101 : vector<16x16xf32>
    %103 = arith.addf %60, %102 : vector<16x16xf32>
    %104 = vector.broadcast %30 : f32 to vector<16x16xf32>
    %105 = arith.mulf %88, %104 : vector<16x16xf32>
    %106 = arith.addf %61, %105 : vector<16x16xf32>
    %107 = vector.broadcast %36 : f32 to vector<16x16xf32>
    %108 = arith.mulf %88, %107 : vector<16x16xf32>
    %109 = arith.addf %62, %108 : vector<16x16xf32>
    %110 = vector.broadcast %42 : f32 to vector<16x16xf32>
    %111 = arith.mulf %88, %110 : vector<16x16xf32>
    %112 = arith.addf %63, %111 : vector<16x16xf32>
    %c0_28 = arith.constant 0 : index
    %c1_29 = arith.constant 1 : index
    %c0_30 = arith.constant 0 : index
    %c0_31 = arith.constant 0 : index
    %c0_32 = arith.constant 0 : index
    %113 = vector.load %arg2[%c0_28, %c1_29, %c0_30, %c0_31, %c0_32] : memref<1x4x1x20x20xf32, #tpu.memory_space<vmem>>, vector<1x1x1x20x16xf32>
    %114 = vector.shape_cast %113 : vector<1x1x1x20x16xf32> to vector<20x16xf32>
    %cst_33 = arith.constant -0.0833333358 : f32
    %115 = vector.broadcast %cst_33 : f32 to vector<20x16xf32>
    %116 = arith.mulf %114, %115 : vector<20x16xf32>
    %cst_34 = arith.constant 0.166666672 : f32
    %117 = vector.broadcast %cst_34 : f32 to vector<20x16xf32>
    %118 = arith.mulf %114, %117 : vector<20x16xf32>
    %cst_35 = arith.constant -0.166666672 : f32
    %119 = vector.broadcast %cst_35 : f32 to vector<20x16xf32>
    %120 = arith.mulf %114, %119 : vector<20x16xf32>
    %c0_36 = arith.constant 0 : index
    %c1_37 = arith.constant 1 : index
    %c0_38 = arith.constant 0 : index
    %c0_39 = arith.constant 0 : index
    %c1_40 = arith.constant 1 : index
    %121 = vector.load %arg2[%c0_36, %c1_37, %c0_38, %c0_39, %c1_40] : memref<1x4x1x20x20xf32, #tpu.memory_space<vmem>>, vector<1x1x1x20x16xf32>
    %122 = vector.shape_cast %121 : vector<1x1x1x20x16xf32> to vector<20x16xf32>
    %cst_41 = arith.constant 0.166666672 : f32
    %123 = vector.broadcast %cst_41 : f32 to vector<20x16xf32>
    %124 = arith.mulf %122, %123 : vector<20x16xf32>
    %125 = arith.addf %116, %124 : vector<20x16xf32>
    %cst_42 = arith.constant -5.000000e-01 : f32
    %126 = vector.broadcast %cst_42 : f32 to vector<20x16xf32>
    %127 = arith.mulf %122, %126 : vector<20x16xf32>
    %128 = arith.addf %118, %127 : vector<20x16xf32>
    %cst_43 = arith.constant 0.666666686 : f32
    %129 = vector.broadcast %cst_43 : f32 to vector<20x16xf32>
    %130 = arith.mulf %122, %129 : vector<20x16xf32>
    %131 = arith.addf %120, %130 : vector<20x16xf32>
    %cst_44 = arith.constant 5.000000e-01 : f32
    %132 = vector.broadcast %cst_44 : f32 to vector<20x16xf32>
    %133 = arith.mulf %122, %132 : vector<20x16xf32>
    %c0_45 = arith.constant 0 : index
    %c1_46 = arith.constant 1 : index
    %c0_47 = arith.constant 0 : index
    %c0_48 = arith.constant 0 : index
    %c2_49 = arith.constant 2 : index
    %134 = vector.load %arg2[%c0_45, %c1_46, %c0_47, %c0_48, %c2_49] : memref<1x4x1x20x20xf32, #tpu.memory_space<vmem>>, vector<1x1x1x20x16xf32>
    %135 = vector.shape_cast %134 : vector<1x1x1x20x16xf32> to vector<20x16xf32>
    %cst_50 = arith.constant -0.166666672 : f32
    %136 = vector.broadcast %cst_50 : f32 to vector<20x16xf32>
    %137 = arith.mulf %135, %136 : vector<20x16xf32>
    %138 = arith.addf %125, %137 : vector<20x16xf32>
    %cst_51 = arith.constant 0.666666686 : f32
    %139 = vector.broadcast %cst_51 : f32 to vector<20x16xf32>
    %140 = arith.mulf %135, %139 : vector<20x16xf32>
    %141 = arith.addf %128, %140 : vector<20x16xf32>
    %cst_52 = arith.constant -1.000000e+00 : f32
    %142 = vector.broadcast %cst_52 : f32 to vector<20x16xf32>
    %143 = arith.mulf %135, %142 : vector<20x16xf32>
    %144 = arith.addf %131, %143 : vector<20x16xf32>
    %cst_53 = arith.constant -1.000000e+00 : f32
    %145 = vector.broadcast %cst_53 : f32 to vector<20x16xf32>
    %146 = arith.mulf %135, %145 : vector<20x16xf32>
    %147 = arith.addf %133, %146 : vector<20x16xf32>
    %c0_54 = arith.constant 0 : index
    %c1_55 = arith.constant 1 : index
    %c0_56 = arith.constant 0 : index
    %c0_57 = arith.constant 0 : index
    %c3_58 = arith.constant 3 : index
    %148 = vector.load %arg2[%c0_54, %c1_55, %c0_56, %c0_57, %c3_58] : memref<1x4x1x20x20xf32, #tpu.memory_space<vmem>>, vector<1x1x1x20x16xf32>
    %149 = vector.shape_cast %148 : vector<1x1x1x20x16xf32> to vector<20x16xf32>
    %cst_59 = arith.constant 0.166666672 : f32
    %150 = vector.broadcast %cst_59 : f32 to vector<20x16xf32>
    %151 = arith.mulf %149, %150 : vector<20x16xf32>
    %152 = arith.addf %138, %151 : vector<20x16xf32>
    %cst_60 = arith.constant -5.000000e-01 : f32
    %153 = vector.broadcast %cst_60 : f32 to vector<20x16xf32>
    %154 = arith.mulf %149, %153 : vector<20x16xf32>
    %155 = arith.addf %141, %154 : vector<20x16xf32>
    %cst_61 = arith.constant 0.666666686 : f32
    %156 = vector.broadcast %cst_61 : f32 to vector<20x16xf32>
    %157 = arith.mulf %149, %156 : vector<20x16xf32>
    %158 = arith.addf %144, %157 : vector<20x16xf32>
    %cst_62 = arith.constant 5.000000e-01 : f32
    %159 = vector.broadcast %cst_62 : f32 to vector<20x16xf32>
    %160 = arith.mulf %149, %159 : vector<20x16xf32>
    %161 = arith.addf %147, %160 : vector<20x16xf32>
    %c0_63 = arith.constant 0 : index
    %c1_64 = arith.constant 1 : index
    %c0_65 = arith.constant 0 : index
    %c0_66 = arith.constant 0 : index
    %c4_67 = arith.constant 4 : index
    %162 = vector.load %arg2[%c0_63, %c1_64, %c0_65, %c0_66, %c4_67] : memref<1x4x1x20x20xf32, #tpu.memory_space<vmem>>, vector<1x1x1x20x16xf32>
    %163 = vector.shape_cast %162 : vector<1x1x1x20x16xf32> to vector<20x16xf32>
    %cst_68 = arith.constant -0.0833333358 : f32
    %164 = vector.broadcast %cst_68 : f32 to vector<20x16xf32>
    %165 = arith.mulf %163, %164 : vector<20x16xf32>
    %166 = arith.addf %152, %165 : vector<20x16xf32>
    %cst_69 = arith.constant 0.166666672 : f32
    %167 = vector.broadcast %cst_69 : f32 to vector<20x16xf32>
    %168 = arith.mulf %163, %167 : vector<20x16xf32>
    %169 = arith.addf %155, %168 : vector<20x16xf32>
    %cst_70 = arith.constant -0.166666672 : f32
    %170 = vector.broadcast %cst_70 : f32 to vector<20x16xf32>
    %171 = arith.mulf %163, %170 : vector<20x16xf32>
    %172 = arith.addf %158, %171 : vector<20x16xf32>
    %173 = vector.extract_strided_slice %161 {offsets = [2, 0], sizes = [16, 16], strides = [1, 1]} : vector<20x16xf32> to vector<16x16xf32>
    %174 = vector.extract_strided_slice %161 {offsets = [1, 0], sizes = [16, 16], strides = [1, 1]} : vector<20x16xf32> to vector<16x16xf32>
    %175 = vector.extract_strided_slice %161 {offsets = [3, 0], sizes = [16, 16], strides = [1, 1]} : vector<20x16xf32> to vector<16x16xf32>
    %176 = arith.addf %174, %175 : vector<16x16xf32>
    %cst_71 = arith.constant 5.000000e-01 : f32
    %177 = vector.broadcast %cst_71 : f32 to vector<16x16xf32>
    %178 = arith.mulf %177, %176 : vector<16x16xf32>
    %179 = arith.subf %173, %178 : vector<16x16xf32>
    %180 = vector.extract_strided_slice %166 {offsets = [0, 0], sizes = [16, 16], strides = [1, 1]} : vector<20x16xf32> to vector<16x16xf32>
    %181 = vector.extract_strided_slice %166 {offsets = [4, 0], sizes = [16, 16], strides = [1, 1]} : vector<20x16xf32> to vector<16x16xf32>
    %182 = arith.addf %180, %181 : vector<16x16xf32>
    %183 = vector.extract_strided_slice %169 {offsets = [1, 0], sizes = [16, 16], strides = [1, 1]} : vector<20x16xf32> to vector<16x16xf32>
    %184 = arith.addf %182, %183 : vector<16x16xf32>
    %185 = vector.extract_strided_slice %169 {offsets = [3, 0], sizes = [16, 16], strides = [1, 1]} : vector<20x16xf32> to vector<16x16xf32>
    %186 = arith.addf %184, %185 : vector<16x16xf32>
    %187 = vector.extract_strided_slice %172 {offsets = [2, 0], sizes = [16, 16], strides = [1, 1]} : vector<20x16xf32> to vector<16x16xf32>
    %188 = arith.addf %186, %187 : vector<16x16xf32>
    %cst_72 = arith.constant -3.000000e+00 : f32
    %cst_73 = arith.constant 3.000000e+00 : f32
    %189 = vector.broadcast %cst_72 : f32 to vector<16x16xf32>
    %190 = arith.maximumf %189, %179 : vector<16x16xf32>
    %191 = vector.broadcast %cst_73 : f32 to vector<16x16xf32>
    %192 = arith.minimumf %191, %190 : vector<16x16xf32>
    %193 = vector.broadcast %1 : f32 to vector<16x16xf32>
    %194 = arith.mulf %192, %193 : vector<16x16xf32>
    %195 = arith.addf %91, %194 : vector<16x16xf32>
    %196 = vector.broadcast %7 : f32 to vector<16x16xf32>
    %197 = arith.mulf %192, %196 : vector<16x16xf32>
    %198 = arith.addf %94, %197 : vector<16x16xf32>
    %199 = vector.broadcast %13 : f32 to vector<16x16xf32>
    %200 = arith.mulf %192, %199 : vector<16x16xf32>
    %201 = arith.addf %97, %200 : vector<16x16xf32>
    %202 = vector.broadcast %19 : f32 to vector<16x16xf32>
    %203 = arith.mulf %192, %202 : vector<16x16xf32>
    %204 = arith.addf %100, %203 : vector<16x16xf32>
    %205 = vector.broadcast %25 : f32 to vector<16x16xf32>
    %206 = arith.mulf %192, %205 : vector<16x16xf32>
    %207 = arith.addf %103, %206 : vector<16x16xf32>
    %208 = vector.broadcast %31 : f32 to vector<16x16xf32>
    %209 = arith.mulf %192, %208 : vector<16x16xf32>
    %210 = arith.addf %106, %209 : vector<16x16xf32>
    %211 = vector.broadcast %37 : f32 to vector<16x16xf32>
    %212 = arith.mulf %192, %211 : vector<16x16xf32>
    %213 = arith.addf %109, %212 : vector<16x16xf32>
    %214 = vector.broadcast %43 : f32 to vector<16x16xf32>
    %215 = arith.mulf %192, %214 : vector<16x16xf32>
    %216 = arith.addf %112, %215 : vector<16x16xf32>
    %cst_74 = arith.constant -3.000000e+00 : f32
    %cst_75 = arith.constant 3.000000e+00 : f32
    %217 = vector.broadcast %cst_74 : f32 to vector<16x16xf32>
    %218 = arith.maximumf %217, %188 : vector<16x16xf32>
    %219 = vector.broadcast %cst_75 : f32 to vector<16x16xf32>
    %220 = arith.minimumf %219, %218 : vector<16x16xf32>
    %221 = vector.broadcast %2 : f32 to vector<16x16xf32>
    %222 = arith.mulf %220, %221 : vector<16x16xf32>
    %223 = arith.addf %195, %222 : vector<16x16xf32>
    %224 = vector.broadcast %8 : f32 to vector<16x16xf32>
    %225 = arith.mulf %220, %224 : vector<16x16xf32>
    %226 = arith.addf %198, %225 : vector<16x16xf32>
    %227 = vector.broadcast %14 : f32 to vector<16x16xf32>
    %228 = arith.mulf %220, %227 : vector<16x16xf32>
    %229 = arith.addf %201, %228 : vector<16x16xf32>
    %230 = vector.broadcast %20 : f32 to vector<16x16xf32>
    %231 = arith.mulf %220, %230 : vector<16x16xf32>
    %232 = arith.addf %204, %231 : vector<16x16xf32>
    %233 = vector.broadcast %26 : f32 to vector<16x16xf32>
    %234 = arith.mulf %220, %233 : vector<16x16xf32>
    %235 = arith.addf %207, %234 : vector<16x16xf32>
    %236 = vector.broadcast %32 : f32 to vector<16x16xf32>
    %237 = arith.mulf %220, %236 : vector<16x16xf32>
    %238 = arith.addf %210, %237 : vector<16x16xf32>
    %239 = vector.broadcast %38 : f32 to vector<16x16xf32>
    %240 = arith.mulf %220, %239 : vector<16x16xf32>
    %241 = arith.addf %213, %240 : vector<16x16xf32>
    %242 = vector.broadcast %44 : f32 to vector<16x16xf32>
    %243 = arith.mulf %220, %242 : vector<16x16xf32>
    %244 = arith.addf %216, %243 : vector<16x16xf32>
    %c0_76 = arith.constant 0 : index
    %c2_77 = arith.constant 2 : index
    %c0_78 = arith.constant 0 : index
    %c0_79 = arith.constant 0 : index
    %c0_80 = arith.constant 0 : index
    %245 = vector.load %arg2[%c0_76, %c2_77, %c0_78, %c0_79, %c0_80] : memref<1x4x1x20x20xf32, #tpu.memory_space<vmem>>, vector<1x1x1x20x16xf32>
    %246 = vector.shape_cast %245 : vector<1x1x1x20x16xf32> to vector<20x16xf32>
    %cst_81 = arith.constant -0.0833333358 : f32
    %247 = vector.broadcast %cst_81 : f32 to vector<20x16xf32>
    %248 = arith.mulf %246, %247 : vector<20x16xf32>
    %cst_82 = arith.constant 0.166666672 : f32
    %249 = vector.broadcast %cst_82 : f32 to vector<20x16xf32>
    %250 = arith.mulf %246, %249 : vector<20x16xf32>
    %cst_83 = arith.constant -0.166666672 : f32
    %251 = vector.broadcast %cst_83 : f32 to vector<20x16xf32>
    %252 = arith.mulf %246, %251 : vector<20x16xf32>
    %c0_84 = arith.constant 0 : index
    %c2_85 = arith.constant 2 : index
    %c0_86 = arith.constant 0 : index
    %c0_87 = arith.constant 0 : index
    %c1_88 = arith.constant 1 : index
    %253 = vector.load %arg2[%c0_84, %c2_85, %c0_86, %c0_87, %c1_88] : memref<1x4x1x20x20xf32, #tpu.memory_space<vmem>>, vector<1x1x1x20x16xf32>
    %254 = vector.shape_cast %253 : vector<1x1x1x20x16xf32> to vector<20x16xf32>
    %cst_89 = arith.constant 0.166666672 : f32
    %255 = vector.broadcast %cst_89 : f32 to vector<20x16xf32>
    %256 = arith.mulf %254, %255 : vector<20x16xf32>
    %257 = arith.addf %248, %256 : vector<20x16xf32>
    %cst_90 = arith.constant -5.000000e-01 : f32
    %258 = vector.broadcast %cst_90 : f32 to vector<20x16xf32>
    %259 = arith.mulf %254, %258 : vector<20x16xf32>
    %260 = arith.addf %250, %259 : vector<20x16xf32>
    %cst_91 = arith.constant 0.666666686 : f32
    %261 = vector.broadcast %cst_91 : f32 to vector<20x16xf32>
    %262 = arith.mulf %254, %261 : vector<20x16xf32>
    %263 = arith.addf %252, %262 : vector<20x16xf32>
    %cst_92 = arith.constant 5.000000e-01 : f32
    %264 = vector.broadcast %cst_92 : f32 to vector<20x16xf32>
    %265 = arith.mulf %254, %264 : vector<20x16xf32>
    %c0_93 = arith.constant 0 : index
    %c2_94 = arith.constant 2 : index
    %c0_95 = arith.constant 0 : index
    %c0_96 = arith.constant 0 : index
    %c2_97 = arith.constant 2 : index
    %266 = vector.load %arg2[%c0_93, %c2_94, %c0_95, %c0_96, %c2_97] : memref<1x4x1x20x20xf32, #tpu.memory_space<vmem>>, vector<1x1x1x20x16xf32>
    %267 = vector.shape_cast %266 : vector<1x1x1x20x16xf32> to vector<20x16xf32>
    %cst_98 = arith.constant -0.166666672 : f32
    %268 = vector.broadcast %cst_98 : f32 to vector<20x16xf32>
    %269 = arith.mulf %267, %268 : vector<20x16xf32>
    %270 = arith.addf %257, %269 : vector<20x16xf32>
    %cst_99 = arith.constant 0.666666686 : f32
    %271 = vector.broadcast %cst_99 : f32 to vector<20x16xf32>
    %272 = arith.mulf %267, %271 : vector<20x16xf32>
    %273 = arith.addf %260, %272 : vector<20x16xf32>
    %cst_100 = arith.constant -1.000000e+00 : f32
    %274 = vector.broadcast %cst_100 : f32 to vector<20x16xf32>
    %275 = arith.mulf %267, %274 : vector<20x16xf32>
    %276 = arith.addf %263, %275 : vector<20x16xf32>
    %cst_101 = arith.constant -1.000000e+00 : f32
    %277 = vector.broadcast %cst_101 : f32 to vector<20x16xf32>
    %278 = arith.mulf %267, %277 : vector<20x16xf32>
    %279 = arith.addf %265, %278 : vector<20x16xf32>
    %c0_102 = arith.constant 0 : index
    %c2_103 = arith.constant 2 : index
    %c0_104 = arith.constant 0 : index
    %c0_105 = arith.constant 0 : index
    %c3_106 = arith.constant 3 : index
    %280 = vector.load %arg2[%c0_102, %c2_103, %c0_104, %c0_105, %c3_106] : memref<1x4x1x20x20xf32, #tpu.memory_space<vmem>>, vector<1x1x1x20x16xf32>
    %281 = vector.shape_cast %280 : vector<1x1x1x20x16xf32> to vector<20x16xf32>
    %cst_107 = arith.constant 0.166666672 : f32
    %282 = vector.broadcast %cst_107 : f32 to vector<20x16xf32>
    %283 = arith.mulf %281, %282 : vector<20x16xf32>
    %284 = arith.addf %270, %283 : vector<20x16xf32>
    %cst_108 = arith.constant -5.000000e-01 : f32
    %285 = vector.broadcast %cst_108 : f32 to vector<20x16xf32>
    %286 = arith.mulf %281, %285 : vector<20x16xf32>
    %287 = arith.addf %273, %286 : vector<20x16xf32>
    %cst_109 = arith.constant 0.666666686 : f32
    %288 = vector.broadcast %cst_109 : f32 to vector<20x16xf32>
    %289 = arith.mulf %281, %288 : vector<20x16xf32>
    %290 = arith.addf %276, %289 : vector<20x16xf32>
    %cst_110 = arith.constant 5.000000e-01 : f32
    %291 = vector.broadcast %cst_110 : f32 to vector<20x16xf32>
    %292 = arith.mulf %281, %291 : vector<20x16xf32>
    %293 = arith.addf %279, %292 : vector<20x16xf32>
    %c0_111 = arith.constant 0 : index
    %c2_112 = arith.constant 2 : index
    %c0_113 = arith.constant 0 : index
    %c0_114 = arith.constant 0 : index
    %c4_115 = arith.constant 4 : index
    %294 = vector.load %arg2[%c0_111, %c2_112, %c0_113, %c0_114, %c4_115] : memref<1x4x1x20x20xf32, #tpu.memory_space<vmem>>, vector<1x1x1x20x16xf32>
    %295 = vector.shape_cast %294 : vector<1x1x1x20x16xf32> to vector<20x16xf32>
    %cst_116 = arith.constant -0.0833333358 : f32
    %296 = vector.broadcast %cst_116 : f32 to vector<20x16xf32>
    %297 = arith.mulf %295, %296 : vector<20x16xf32>
    %298 = arith.addf %284, %297 : vector<20x16xf32>
    %cst_117 = arith.constant 0.166666672 : f32
    %299 = vector.broadcast %cst_117 : f32 to vector<20x16xf32>
    %300 = arith.mulf %295, %299 : vector<20x16xf32>
    %301 = arith.addf %287, %300 : vector<20x16xf32>
    %cst_118 = arith.constant -0.166666672 : f32
    %302 = vector.broadcast %cst_118 : f32 to vector<20x16xf32>
    %303 = arith.mulf %295, %302 : vector<20x16xf32>
    %304 = arith.addf %290, %303 : vector<20x16xf32>
    %305 = vector.extract_strided_slice %293 {offsets = [2, 0], sizes = [16, 16], strides = [1, 1]} : vector<20x16xf32> to vector<16x16xf32>
    %306 = vector.extract_strided_slice %298 {offsets = [0, 0], sizes = [16, 16], strides = [1, 1]} : vector<20x16xf32> to vector<16x16xf32>
    %307 = vector.extract_strided_slice %298 {offsets = [4, 0], sizes = [16, 16], strides = [1, 1]} : vector<20x16xf32> to vector<16x16xf32>
    %308 = arith.addf %306, %307 : vector<16x16xf32>
    %309 = vector.extract_strided_slice %301 {offsets = [1, 0], sizes = [16, 16], strides = [1, 1]} : vector<20x16xf32> to vector<16x16xf32>
    %310 = arith.addf %308, %309 : vector<16x16xf32>
    %311 = vector.extract_strided_slice %301 {offsets = [3, 0], sizes = [16, 16], strides = [1, 1]} : vector<20x16xf32> to vector<16x16xf32>
    %312 = arith.addf %310, %311 : vector<16x16xf32>
    %313 = vector.extract_strided_slice %304 {offsets = [2, 0], sizes = [16, 16], strides = [1, 1]} : vector<20x16xf32> to vector<16x16xf32>
    %314 = arith.addf %312, %313 : vector<16x16xf32>
    %cst_119 = arith.constant -3.000000e+00 : f32
    %cst_120 = arith.constant 3.000000e+00 : f32
    %315 = vector.broadcast %cst_119 : f32 to vector<16x16xf32>
    %316 = arith.maximumf %315, %314 : vector<16x16xf32>
    %317 = vector.broadcast %cst_120 : f32 to vector<16x16xf32>
    %318 = arith.minimumf %317, %316 : vector<16x16xf32>
    %319 = vector.broadcast %3 : f32 to vector<16x16xf32>
    %320 = arith.mulf %318, %319 : vector<16x16xf32>
    %321 = arith.addf %223, %320 : vector<16x16xf32>
    %322 = vector.broadcast %9 : f32 to vector<16x16xf32>
    %323 = arith.mulf %318, %322 : vector<16x16xf32>
    %324 = arith.addf %226, %323 : vector<16x16xf32>
    %325 = vector.broadcast %15 : f32 to vector<16x16xf32>
    %326 = arith.mulf %318, %325 : vector<16x16xf32>
    %327 = arith.addf %229, %326 : vector<16x16xf32>
    %328 = vector.broadcast %21 : f32 to vector<16x16xf32>
    %329 = arith.mulf %318, %328 : vector<16x16xf32>
    %330 = arith.addf %232, %329 : vector<16x16xf32>
    %331 = vector.broadcast %27 : f32 to vector<16x16xf32>
    %332 = arith.mulf %318, %331 : vector<16x16xf32>
    %333 = arith.addf %235, %332 : vector<16x16xf32>
    %334 = vector.broadcast %33 : f32 to vector<16x16xf32>
    %335 = arith.mulf %318, %334 : vector<16x16xf32>
    %336 = arith.addf %238, %335 : vector<16x16xf32>
    %337 = vector.broadcast %39 : f32 to vector<16x16xf32>
    %338 = arith.mulf %318, %337 : vector<16x16xf32>
    %339 = arith.addf %241, %338 : vector<16x16xf32>
    %340 = vector.broadcast %45 : f32 to vector<16x16xf32>
    %341 = arith.mulf %318, %340 : vector<16x16xf32>
    %342 = arith.addf %244, %341 : vector<16x16xf32>
    %cst_121 = arith.constant -3.000000e+00 : f32
    %cst_122 = arith.constant 3.000000e+00 : f32
    %343 = vector.broadcast %cst_121 : f32 to vector<16x16xf32>
    %344 = arith.maximumf %343, %305 : vector<16x16xf32>
    %345 = vector.broadcast %cst_122 : f32 to vector<16x16xf32>
    %346 = arith.minimumf %345, %344 : vector<16x16xf32>
    %347 = vector.broadcast %4 : f32 to vector<16x16xf32>
    %348 = arith.mulf %346, %347 : vector<16x16xf32>
    %349 = arith.addf %321, %348 : vector<16x16xf32>
    %350 = vector.broadcast %10 : f32 to vector<16x16xf32>
    %351 = arith.mulf %346, %350 : vector<16x16xf32>
    %352 = arith.addf %324, %351 : vector<16x16xf32>
    %353 = vector.broadcast %16 : f32 to vector<16x16xf32>
    %354 = arith.mulf %346, %353 : vector<16x16xf32>
    %355 = arith.addf %327, %354 : vector<16x16xf32>
    %356 = vector.broadcast %22 : f32 to vector<16x16xf32>
    %357 = arith.mulf %346, %356 : vector<16x16xf32>
    %358 = arith.addf %330, %357 : vector<16x16xf32>
    %359 = vector.broadcast %28 : f32 to vector<16x16xf32>
    %360 = arith.mulf %346, %359 : vector<16x16xf32>
    %361 = arith.addf %333, %360 : vector<16x16xf32>
    %362 = vector.broadcast %34 : f32 to vector<16x16xf32>
    %363 = arith.mulf %346, %362 : vector<16x16xf32>
    %364 = arith.addf %336, %363 : vector<16x16xf32>
    %365 = vector.broadcast %40 : f32 to vector<16x16xf32>
    %366 = arith.mulf %346, %365 : vector<16x16xf32>
    %367 = arith.addf %339, %366 : vector<16x16xf32>
    %368 = vector.broadcast %46 : f32 to vector<16x16xf32>
    %369 = arith.mulf %346, %368 : vector<16x16xf32>
    %370 = arith.addf %342, %369 : vector<16x16xf32>
    %c0_123 = arith.constant 0 : index
    %c3_124 = arith.constant 3 : index
    %c0_125 = arith.constant 0 : index
    %c0_126 = arith.constant 0 : index
    %c1_127 = arith.constant 1 : index
    %371 = vector.load %arg2[%c0_123, %c3_124, %c0_125, %c0_126, %c1_127] : memref<1x4x1x20x20xf32, #tpu.memory_space<vmem>>, vector<1x1x1x20x16xf32>
    %372 = vector.shape_cast %371 : vector<1x1x1x20x16xf32> to vector<20x16xf32>
    %cst_128 = arith.constant 5.000000e-01 : f32
    %373 = vector.broadcast %cst_128 : f32 to vector<20x16xf32>
    %374 = arith.mulf %372, %373 : vector<20x16xf32>
    %c0_129 = arith.constant 0 : index
    %c3_130 = arith.constant 3 : index
    %c0_131 = arith.constant 0 : index
    %c0_132 = arith.constant 0 : index
    %c2_133 = arith.constant 2 : index
    %375 = vector.load %arg2[%c0_129, %c3_130, %c0_131, %c0_132, %c2_133] : memref<1x4x1x20x20xf32, #tpu.memory_space<vmem>>, vector<1x1x1x20x16xf32>
    %376 = vector.shape_cast %375 : vector<1x1x1x20x16xf32> to vector<20x16xf32>
    %cst_134 = arith.constant -1.000000e+00 : f32
    %377 = vector.broadcast %cst_134 : f32 to vector<20x16xf32>
    %378 = arith.mulf %376, %377 : vector<20x16xf32>
    %379 = arith.addf %374, %378 : vector<20x16xf32>
    %c0_135 = arith.constant 0 : index
    %c3_136 = arith.constant 3 : index
    %c0_137 = arith.constant 0 : index
    %c0_138 = arith.constant 0 : index
    %c3_139 = arith.constant 3 : index
    %380 = vector.load %arg2[%c0_135, %c3_136, %c0_137, %c0_138, %c3_139] : memref<1x4x1x20x20xf32, #tpu.memory_space<vmem>>, vector<1x1x1x20x16xf32>
    %381 = vector.shape_cast %380 : vector<1x1x1x20x16xf32> to vector<20x16xf32>
    %cst_140 = arith.constant 5.000000e-01 : f32
    %382 = vector.broadcast %cst_140 : f32 to vector<20x16xf32>
    %383 = arith.mulf %381, %382 : vector<20x16xf32>
    %384 = arith.addf %379, %383 : vector<20x16xf32>
    %385 = vector.extract_strided_slice %384 {offsets = [2, 0], sizes = [16, 16], strides = [1, 1]} : vector<20x16xf32> to vector<16x16xf32>
    %cst_141 = arith.constant -3.000000e+00 : f32
    %cst_142 = arith.constant 3.000000e+00 : f32
    %386 = vector.broadcast %cst_141 : f32 to vector<16x16xf32>
    %387 = arith.maximumf %386, %385 : vector<16x16xf32>
    %388 = vector.broadcast %cst_142 : f32 to vector<16x16xf32>
    %389 = arith.minimumf %388, %387 : vector<16x16xf32>
    %390 = vector.broadcast %5 : f32 to vector<16x16xf32>
    %391 = arith.mulf %389, %390 : vector<16x16xf32>
    %392 = arith.addf %349, %391 : vector<16x16xf32>
    %393 = vector.broadcast %11 : f32 to vector<16x16xf32>
    %394 = arith.mulf %389, %393 : vector<16x16xf32>
    %395 = arith.addf %352, %394 : vector<16x16xf32>
    %396 = vector.broadcast %17 : f32 to vector<16x16xf32>
    %397 = arith.mulf %389, %396 : vector<16x16xf32>
    %398 = arith.addf %355, %397 : vector<16x16xf32>
    %399 = vector.broadcast %23 : f32 to vector<16x16xf32>
    %400 = arith.mulf %389, %399 : vector<16x16xf32>
    %401 = arith.addf %358, %400 : vector<16x16xf32>
    %402 = vector.broadcast %29 : f32 to vector<16x16xf32>
    %403 = arith.mulf %389, %402 : vector<16x16xf32>
    %404 = arith.addf %361, %403 : vector<16x16xf32>
    %405 = vector.broadcast %35 : f32 to vector<16x16xf32>
    %406 = arith.mulf %389, %405 : vector<16x16xf32>
    %407 = arith.addf %364, %406 : vector<16x16xf32>
    %408 = vector.broadcast %41 : f32 to vector<16x16xf32>
    %409 = arith.mulf %389, %408 : vector<16x16xf32>
    %410 = arith.addf %367, %409 : vector<16x16xf32>
    %411 = vector.broadcast %47 : f32 to vector<16x16xf32>
    %412 = arith.mulf %389, %411 : vector<16x16xf32>
    %413 = arith.addf %370, %412 : vector<16x16xf32>
    %cst_143 = arith.constant 0.000000e+00 : f32
    %414 = vector.broadcast %cst_143 : f32 to vector<16x16xf32>
    %415 = arith.maximumf %392, %414 : vector<16x16xf32>
    %c0_144 = arith.constant 0 : index
    %c0_145 = arith.constant 0 : index
    %c0_146 = arith.constant 0 : index
    %c0_147 = arith.constant 0 : index
    %416 = vector.load %arg5[%c0_144, %c0_145, %c0_146, %c0_147] : memref<1x8x16x16xf32, #tpu.memory_space<vmem>>, vector<1x1x16x16xf32>
    %417 = vector.shape_cast %416 : vector<1x1x16x16xf32> to vector<16x16xf32>
    %418 = vector.shape_cast %415 : vector<16x16xf32> to vector<1x1x16x16xf32>
    tpu.vector_store %arg5[%c0_144, %c0_145, %c0_146, %c0_147], %418 {strides = array<i32>} : memref<1x8x16x16xf32, #tpu.memory_space<vmem>>, vector<1x1x16x16xf32>,
    %cst_148 = arith.constant 0.000000e+00 : f32
    %419 = vector.broadcast %cst_148 : f32 to vector<16x16xf32>
    %420 = arith.maximumf %395, %419 : vector<16x16xf32>
    %c0_149 = arith.constant 0 : index
    %c1_150 = arith.constant 1 : index
    %c0_151 = arith.constant 0 : index
    %c0_152 = arith.constant 0 : index
    %421 = vector.load %arg5[%c0_149, %c1_150, %c0_151, %c0_152] : memref<1x8x16x16xf32, #tpu.memory_space<vmem>>, vector<1x1x16x16xf32>
    %422 = vector.shape_cast %421 : vector<1x1x16x16xf32> to vector<16x16xf32>
    %423 = vector.shape_cast %420 : vector<16x16xf32> to vector<1x1x16x16xf32>
    tpu.vector_store %arg5[%c0_149, %c1_150, %c0_151, %c0_152], %423 {strides = array<i32>} : memref<1x8x16x16xf32, #tpu.memory_space<vmem>>, vector<1x1x16x16xf32>,
    %cst_153 = arith.constant 0.000000e+00 : f32
    %424 = vector.broadcast %cst_153 : f32 to vector<16x16xf32>
    %425 = arith.maximumf %398, %424 : vector<16x16xf32>
    %c0_154 = arith.constant 0 : index
    %c2_155 = arith.constant 2 : index
    %c0_156 = arith.constant 0 : index
    %c0_157 = arith.constant 0 : index
    %426 = vector.load %arg5[%c0_154, %c2_155, %c0_156, %c0_157] : memref<1x8x16x16xf32, #tpu.memory_space<vmem>>, vector<1x1x16x16xf32>
    %427 = vector.shape_cast %426 : vector<1x1x16x16xf32> to vector<16x16xf32>
    %428 = vector.shape_cast %425 : vector<16x16xf32> to vector<1x1x16x16xf32>
    tpu.vector_store %arg5[%c0_154, %c2_155, %c0_156, %c0_157], %428 {strides = array<i32>} : memref<1x8x16x16xf32, #tpu.memory_space<vmem>>, vector<1x1x16x16xf32>,
    %cst_158 = arith.constant 0.000000e+00 : f32
    %429 = vector.broadcast %cst_158 : f32 to vector<16x16xf32>
    %430 = arith.maximumf %401, %429 : vector<16x16xf32>
    %c0_159 = arith.constant 0 : index
    %c3_160 = arith.constant 3 : index
    %c0_161 = arith.constant 0 : index
    %c0_162 = arith.constant 0 : index
    %431 = vector.load %arg5[%c0_159, %c3_160, %c0_161, %c0_162] : memref<1x8x16x16xf32, #tpu.memory_space<vmem>>, vector<1x1x16x16xf32>
    %432 = vector.shape_cast %431 : vector<1x1x16x16xf32> to vector<16x16xf32>
    %433 = vector.shape_cast %430 : vector<16x16xf32> to vector<1x1x16x16xf32>
    tpu.vector_store %arg5[%c0_159, %c3_160, %c0_161, %c0_162], %433 {strides = array<i32>} : memref<1x8x16x16xf32, #tpu.memory_space<vmem>>, vector<1x1x16x16xf32>,
    %cst_163 = arith.constant 0.000000e+00 : f32
    %434 = vector.broadcast %cst_163 : f32 to vector<16x16xf32>
    %435 = arith.maximumf %404, %434 : vector<16x16xf32>
    %c0_164 = arith.constant 0 : index
    %c4_165 = arith.constant 4 : index
    %c0_166 = arith.constant 0 : index
    %c0_167 = arith.constant 0 : index
    %436 = vector.load %arg5[%c0_164, %c4_165, %c0_166, %c0_167] : memref<1x8x16x16xf32, #tpu.memory_space<vmem>>, vector<1x1x16x16xf32>
    %437 = vector.shape_cast %436 : vector<1x1x16x16xf32> to vector<16x16xf32>
    %438 = vector.shape_cast %435 : vector<16x16xf32> to vector<1x1x16x16xf32>
    tpu.vector_store %arg5[%c0_164, %c4_165, %c0_166, %c0_167], %438 {strides = array<i32>} : memref<1x8x16x16xf32, #tpu.memory_space<vmem>>, vector<1x1x16x16xf32>,
    %cst_168 = arith.constant 0.000000e+00 : f32
    %439 = vector.broadcast %cst_168 : f32 to vector<16x16xf32>
    %440 = arith.maximumf %407, %439 : vector<16x16xf32>
    %c0_169 = arith.constant 0 : index
    %c5_170 = arith.constant 5 : index
    %c0_171 = arith.constant 0 : index
    %c0_172 = arith.constant 0 : index
    %441 = vector.load %arg5[%c0_169, %c5_170, %c0_171, %c0_172] : memref<1x8x16x16xf32, #tpu.memory_space<vmem>>, vector<1x1x16x16xf32>
    %442 = vector.shape_cast %441 : vector<1x1x16x16xf32> to vector<16x16xf32>
    %443 = vector.shape_cast %440 : vector<16x16xf32> to vector<1x1x16x16xf32>
    tpu.vector_store %arg5[%c0_169, %c5_170, %c0_171, %c0_172], %443 {strides = array<i32>} : memref<1x8x16x16xf32, #tpu.memory_space<vmem>>, vector<1x1x16x16xf32>,
    %cst_173 = arith.constant 0.000000e+00 : f32
    %444 = vector.broadcast %cst_173 : f32 to vector<16x16xf32>
    %445 = arith.maximumf %410, %444 : vector<16x16xf32>
    %c0_174 = arith.constant 0 : index
    %c6_175 = arith.constant 6 : index
    %c0_176 = arith.constant 0 : index
    %c0_177 = arith.constant 0 : index
    %446 = vector.load %arg5[%c0_174, %c6_175, %c0_176, %c0_177] : memref<1x8x16x16xf32, #tpu.memory_space<vmem>>, vector<1x1x16x16xf32>
    %447 = vector.shape_cast %446 : vector<1x1x16x16xf32> to vector<16x16xf32>
    %448 = vector.shape_cast %445 : vector<16x16xf32> to vector<1x1x16x16xf32>
    tpu.vector_store %arg5[%c0_174, %c6_175, %c0_176, %c0_177], %448 {strides = array<i32>} : memref<1x8x16x16xf32, #tpu.memory_space<vmem>>, vector<1x1x16x16xf32>,
    %cst_178 = arith.constant 0.000000e+00 : f32
    %449 = vector.broadcast %cst_178 : f32 to vector<16x16xf32>
    %450 = arith.maximumf %413, %449 : vector<16x16xf32>
    %c0_179 = arith.constant 0 : index
    %c7_180 = arith.constant 7 : index
    %c0_181 = arith.constant 0 : index
    %c0_182 = arith.constant 0 : index
    %451 = vector.load %arg5[%c0_179, %c7_180, %c0_181, %c0_182] : memref<1x8x16x16xf32, #tpu.memory_space<vmem>>, vector<1x1x16x16xf32>
    %452 = vector.shape_cast %451 : vector<1x1x16x16xf32> to vector<16x16xf32>
    %453 = vector.shape_cast %450 : vector<16x16xf32> to vector<1x1x16x16xf32>
    tpu.vector_store %arg5[%c0_179, %c7_180, %c0_181, %c0_182], %453 {strides = array<i32>} : memref<1x8x16x16xf32, #tpu.memory_space<vmem>>, vector<1x1x16x16xf32>,
    return
  }
  func.func @transform_0(%arg0: i32, %arg1: i32) -> (i32, i32, i32, i32, i32) {
    %c0_i32 = arith.constant 0 : i32
    %c0_i32_0 = arith.constant 0 : i32
    %c0_i32_1 = arith.constant 0 : i32
    %c0_i32_2 = arith.constant 0 : i32
    return %arg0, %c0_i32, %arg1, %c0_i32_0, %c0_i32_1 : i32, i32, i32, i32, i32
  }
  func.func @transform_1(%arg0: i32, %arg1: i32) -> i32 {
    %c0_i32 = arith.constant 0 : i32
    %c0_i32_0 = arith.constant 0 : i32
    return %c0_i32 : i32
  }
  func.func @transform_2(%arg0: i32, %arg1: i32) -> i32 {
    %c0_i32 = arith.constant 0 : i32
    %c0_i32_0 = arith.constant 0 : i32
    return %c0_i32 : i32
  }
  func.func @transform_3(%arg0: i32, %arg1: i32) -> (i32, i32, i32, i32) {
    %c0_i32 = arith.constant 0 : i32
    %c0_i32_0 = arith.constant 0 : i32
    %c0_i32_1 = arith.constant 0 : i32
    return %arg0, %c0_i32, %arg1, %c0_i32_0 : i32, i32, i32, i32
  }
}

</mosaic_0001>

<llo_original>
// kernel: tpu_custom_call.1
$region0: #{tpu_custom_call.1}
  #allocation0 [shape = 'u32[]', space=smem, size = 0x4, offset = 0x4, fixed_abs, tag = 'smem constant byte address 0x4 - core index']
  #allocation1 [shape = 'u32[144,128]{1,0:T(1,128)}', space=vmem, size = 0x12000, scoped, tag = 'internal scratch']
  %s0 = inlined_call_operand.vmem [shape: f32[2,4,1,20,20], index: 0, kind: input, shape index: {}]
  %s1 = inlined_call_operand.vmem [shape: f32[48], index: 1, kind: input, shape index: {}]
  %s2 = inlined_call_operand.vmem [shape: f32[8], index: 2, kind: input, shape index: {}]
  %s3 = inlined_call_operand.hbm [shape: f32[2,8,16,16], index: 3, kind: output, shape index: {}]
  %s4 = sld [smem:[#allocation0]]
  $region53: #{tpu_custom_call.1} parent=0
    _
  %s6 = ssub.s32 1, %s4
  %s7 = scalar_select 0, %s6, %s4
  $region1: #{tpu_custom_call.1} parent=0
    #allocation2 [shape = 'u8[512]{0}', space=smem, size = 0x200, scoped, tag = 'input window, operand 1, single buffered']
    #allocation3 [shape = 's32[2]{0}', space=sflag, size = 0x8, scoped, tag = 'scoped memory for tpu_custom_call.1']
    #allocation4 [shape = 's32[2]{0}', space=sflag, size = 0x8, scoped, tag = 'scoped memory for tpu_custom_call.1']
    #allocation5 [shape = 'u8[512]{0}', space=smem, size = 0x200, scoped, tag = 'input window, operand 2, single buffered']
    #allocation6 [shape = 's32[1]{0}', space=sflag, size = 0x4, scoped, tag = 'scoped memory for tpu_custom_call.1']
    #allocation7 [shape = 'u8[131072]{0}', space=vmem, size = 0x20000, scoped, tag = 'output window, operand 0']
    %8 = vsyncpa [#allocation4], 0
    %9 = vsyncpa [#allocation6], 0
    %10 = vsyncpa [#allocation3], 0
    %s11 = scalar_lea.sflag [#allocation3], 1
    %12 = vsyncpa %s11, 0
    loop: start=0, step=1, limit=4
    $region2: #{tpu_custom_call.1} parent=1 // loop_pre_header
      _
    $region3: #{tpu_custom_call.1} parent=1 // loop_header
      %s14 = sphi 0, %s18
      %p15 = scmp.ge.s32.totalorder %s14, 4
      %s21 = sphi 0, %s33
      %s22 = sphi 0, %s29
      %s23 = sphi 0, %s21
      %s24 = sphi 0, %s22
      %s25 = sphi 0, %s23
      %s26 = sphi 0, %s24
      %s38 = sphi 0, %s40
      %s41 = sphi 0, %s38
      %s42 = sphi 0, %s41
      %s58 = sphi 0, %s42
      %s62 = sphi 0, %s62
      %s64 = sphi 0, %s62
      %s65 = sphi 0, %s64
      %s79 = sphi 0, %s65
      %s83 = sphi 0, %s83
      %s85 = sphi 0, %s83
      %s86 = sphi 0, %s85
      %s100 = sphi 0, %s86
      %s108 = sphi 0, %s110
      %s111 = sphi 0, %s108
      %s112 = sphi 0, %s111
      %s128 = sphi 0, %s112
    $region4: #{tpu_custom_call.1} parent=1 // loop_header_branch
      %17 = sbr.rel (%p15) target = $region8
    $region5: #{tpu_custom_call.1} parent=1 // loop_body
      %s19 = ssub.s32 %s14, 1
      %s20 = ssub.s32 %s14, 2
      %s27 = sadd.s32 1, %s22
      %p28 = scmp.ge.s32.totalorder %s27, 1
      %s29 = scalar_select %p28, 0, %s27
      %s30 = sadd.s32 1, %s21
      %s31 = scalar_select %p28, %s30, %s21
      %p32 = scmp.ge.s32.totalorder %s31, 2
      %s33 = scalar_select %p32, 0, %s31
      %s34 = ssub.s32 %s21, %s33
      %s35 = ssub.s32 %s22, %s29
      %s36 = sor.u32 %s34, %s35
      %p37 = scmp.eq.s32.totalorder %s36, 0
      %s39 = sadd.s32 %s38, 1
      %s40 = scalar_select %p37, %s38, %s39
      %p43 = pneg %p37
      %p44 = scmp.eq.s32.totalorder %s14, 1
      %p45 = por %p43, %p44
      %p46 = scmp.ne.s32.totalorder %s38, %s41
      %p47 = scmp.eq.s32.totalorder %s14, 0
      %p48 = por %p46, %p47
      %p49 = scmp.ne.s32.totalorder %s38, %s41
      %p50 = scmp.eq.s32.totalorder %s19, 1
      %p51 = por %p49, %p50
      %p52 = scmp.ne.s32.totalorder %s41, %s42
      %p53 = scmp.eq.s32.totalorder %s19, 0
      %p54 = por %p52, %p53
      %p55 = scmp.ne.s32.totalorder %s41, %s42
      %p56 = scmp.eq.s32.totalorder %s20, 1
      %p57 = por %p55, %p56
      %p59 = scmp.ne.s32.totalorder %s42, %s58
      %p60 = scmp.eq.s32.totalorder %s20, 0
      %p61 = por %p59, %p60
      %s63 = sadd.s32 %s62, 1
      %p66 = scmp.eq.s32.totalorder %s14, 1
      %p67 = scmp.ne.s32.totalorder %s62, %s64
      %p68 = scmp.eq.s32.totalorder %s14, 0
      %p69 = por %p67, %p68
      %p70 = scmp.ne.s32.totalorder %s62, %s64
      %p71 = scmp.eq.s32.totalorder %s19, 1
      %p72 = por %p70, %p71
      %p73 = scmp.ne.s32.totalorder %s64, %s65
      %p74 = scmp.eq.s32.totalorder %s19, 0
      %p75 = por %p73, %p74
      %p76 = scmp.ne.s32.totalorder %s64, %s65
      %p77 = scmp.eq.s32.totalorder %s20, 1
      %p78 = por %p76, %p77
      %p80 = scmp.ne.s32.totalorder %s65, %s79
      %p81 = scmp.eq.s32.totalorder %s20, 0
      %p82 = por %p80, %p81
      %s84 = sadd.s32 %s83, 1
      %p87 = scmp.eq.s32.totalorder %s14, 1
      %p88 = scmp.ne.s32.totalorder %s83, %s85
      %p89 = scmp.eq.s32.totalorder %s14, 0
      %p90 = por %p88, %p89
      %p91 = scmp.ne.s32.totalorder %s83, %s85
      %p92 = scmp.eq.s32.totalorder %s19, 1
      %p93 = por %p91, %p92
      %p94 = scmp.ne.s32.totalorder %s85, %s86
      %p95 = scmp.eq.s32.totalorder %s19, 0
      %p96 = por %p94, %p95
      %p97 = scmp.ne.s32.totalorder %s85, %s86
      %p98 = scmp.eq.s32.totalorder %s20, 1
      %p99 = por %p97, %p98
      %p101 = scmp.ne.s32.totalorder %s86, %s100
      %p102 = scmp.eq.s32.totalorder %s20, 0
      %p103 = por %p101, %p102
      %s104 = ssub.s32 %s21, %s33
      %s105 = ssub.s32 %s22, %s29
      %s106 = sor.u32 %s104, %s105
      %p107 = scmp.eq.s32.totalorder %s106, 0
      %s109 = sadd.s32 %s108, 1
      %s110 = scalar_select %p107, %s108, %s109
      %p113 = pneg %p107
      %p114 = scmp.eq.s32.totalorder %s14, 1
      %p115 = por %p113, %p114
      %p116 = scmp.ne.s32.totalorder %s108, %s111
      %p117 = scmp.eq.s32.totalorder %s14, 0
      %p118 = por %p116, %p117
      %p119 = scmp.ne.s32.totalorder %s108, %s111
      %p120 = scmp.eq.s32.totalorder %s19, 1
      %p121 = por %p119, %p120
      %p122 = scmp.ne.s32.totalorder %s111, %s112
      %p123 = scmp.eq.s32.totalorder %s19, 0
      %p124 = por %p122, %p123
      %p125 = scmp.ne.s32.totalorder %s111, %s112
      %p126 = scmp.eq.s32.totalorder %s20, 1
      %p127 = por %p125, %p126
      %p129 = scmp.ne.s32.totalorder %s112, %s128
      %p130 = scmp.eq.s32.totalorder %s20, 0
      %p131 = por %p129, %p130
      %p132 = scmp.le.s32.totalorder 1, %s14
      %p133 = scmp.lt.s32.totalorder %s14, 3
      %p134 = pnand %p132, %p133
      %p135 = pneg %p134
      // Predicated region
      $region9: #{tpu_custom_call.1} parent=5 // pred_check
        _
      $region10: #{tpu_custom_call.1} parent=5 // pred_check_branch
        %137 = sbr.rel (%p134) target = $region12
      $region11: #{tpu_custom_call.1} parent=5 // pred_region
        %s138 = ssub.s32 %s14, 1
        // Predicated region
        $region13: #{tpu_custom_call.1} parent=11 // pred_check
          %p139 = pneg %p75
        $region14: #{tpu_custom_call.1} parent=11 // pred_check_branch
          %141 = sbr.rel (%p139) target = $region16
        $region15: #{tpu_custom_call.1} parent=11 // pred_region
          %s143 = ssub.s32 16, 16
          %144 = vsyncadd [#allocation4], %s143
          %s146 = sshll.u32 %s1, 4
          %s147 = int_to_ptr.vmem [resolvable:$true] %s146
          %149 = dma.vmem_to_smem %s147, 16, [#allocation2], [#allocation4]
        $region16: #{tpu_custom_call.1} parent=11 // pred_fallthru
          _
        // Predicated region
        $region17: #{tpu_custom_call.1} parent=11 // pred_check
          %p150 = pneg %p96
        $region18: #{tpu_custom_call.1} parent=11 // pred_check_branch
          %152 = sbr.rel (%p150) target = $region20
        $region19: #{tpu_custom_call.1} parent=11 // pred_region
          %s154 = ssub.s32 16, 16
          %155 = vsyncadd [#allocation6], %s154
          %s157 = sshll.u32 %s2, 4
          %s158 = int_to_ptr.vmem [resolvable:$true] %s157
          %160 = dma.vmem_to_smem %s158, 16, [#allocation5], [#allocation6]
        $region20: #{tpu_custom_call.1} parent=11 // pred_fallthru
          _
      $region12: #{tpu_custom_call.1} parent=5 // pred_fallthru
        _
      %p161 = scmp.lt.s32.totalorder %s14, 2
      // Predicated region
      $region21: #{tpu_custom_call.1} parent=5 // pred_check
        %p162 = pneg %p161
      $region22: #{tpu_custom_call.1} parent=5 // pred_check_branch
        %164 = sbr.rel (%p162) target = $region24
      $region23: #{tpu_custom_call.1} parent=5 // pred_region
        // Predicated region
        $region25: #{tpu_custom_call.1} parent=23 // pred_check
          %p165 = pneg %p48
        $region26: #{tpu_custom_call.1} parent=23 // pred_check_branch
          %167 = sbr.rel (%p165) target = $region28
        $region27: #{tpu_custom_call.1} parent=23 // pred_region
          %p168 = scmp.lt.s32.totalorder %s21, 1
          %s169 = scalar_select %p168, %s21, 1
          %p170 = scmp.lt.s32.totalorder %s22, 0
          %s171 = scalar_select %p170, %s22, 0
          %s172 = smul.addr %s171, 3
          %s173 = smul.addr %s169, 12
          %s174 = sadd.s32 %s172, %s173
          %s175 = smul.addr %s174, 8
          %s176 = scalar_lea.vmem %s0, %s175
        $region28: #{tpu_custom_call.1} parent=23 // pred_fallthru
          _
      $region24: #{tpu_custom_call.1} parent=5 // pred_fallthru
        _
      %p177 = scmp.le.s32.totalorder 1, %s14
      %p178 = scmp.lt.s32.totalorder %s14, 3
      %p179 = pnand %p177, %p178
      %p180 = pneg %p179
      // Predicated region
      $region29: #{tpu_custom_call.1} parent=5 // pred_check
        _
      $region30: #{tpu_custom_call.1} parent=5 // pred_check_branch
        %182 = sbr.rel (%p179) target = $region32
      $region31: #{tpu_custom_call.1} parent=5 // pred_region
        %s183 = ssub.s32 %s14, 1
        // Predicated region
        $region33: #{tpu_custom_call.1} parent=31 // pred_check
          %p184 = pneg %p75
        $region34: #{tpu_custom_call.1} parent=31 // pred_check_branch
          %186 = sbr.rel (%p184) target = $region36
        $region35: #{tpu_custom_call.1} parent=31 // pred_region
          %187 = dma.done [#allocation4], 16
        $region36: #{tpu_custom_call.1} parent=31 // pred_fallthru
          _
        // Predicated region
        $region37: #{tpu_custom_call.1} parent=31 // pred_check
          %p188 = pneg %p96
        $region38: #{tpu_custom_call.1} parent=31 // pred_check_branch
          %190 = sbr.rel (%p188) target = $region40
        $region39: #{tpu_custom_call.1} parent=31 // pred_region
          %191 = dma.done [#allocation6], 16
        $region40: #{tpu_custom_call.1} parent=31 // pred_fallthru
          _
        %192 = sfence
        %p193 = scmp.lt.s32.totalorder %s23, 1
        %s194 = scalar_select %p193, %s23, 1
        %p195 = scmp.lt.s32.totalorder %s24, 0
        %s196 = scalar_select %p195, %s24, 0
        %s197 = smul.addr %s196, 3
        %s198 = smul.addr %s194, 12
        %s199 = sadd.s32 %s197, %s198
        %s200 = smul.addr %s199, 8
        %s201 = scalar_lea.vmem %s0, %s200
        %p202 = pneg %p54
        %p203 = pneg %p51
        %p204 = pneg %p75
        %p205 = pneg %p72
        %p206 = pneg %p96
        %p207 = pneg %p93
        %p208 = pneg %p124
        %p209 = pneg %p121
        %s210 = sand.u32 %s111, 1
        %s211 = scalar_lea.sflag [#allocation3], %s210
        %s212 = sand.u32 %s111, 1
        %s213 = smul.addr %s212, 128
        %s214 = scalar_lea.vmem [#allocation7], %s213
        %p215 = scmp.lt.s32.totalorder %s23, 1
        %s216 = scalar_select %p215, %s23, 1
        %p217 = scmp.lt.s32.totalorder %s24, 0
        %s218 = scalar_select %p217, %s24, 0
        %s219 = smul.addr %s218, 3
        %s220 = smul.addr %s216, 12
        %s221 = sadd.s32 %s219, %s220
        %s222 = smul.addr %s221, 8
        %s223 = scalar_lea.vmem %s0, %s222
        %s224 = smul.u32 2, %s24
        %s225 = sld [smem:[#allocation2]]
        %s226 = sld [smem:[#allocation2 + $0x1]]
        %s227 = sld [smem:[#allocation2 + $0x2]]
        %s228 = sld [smem:[#allocation2 + $0x3]]
        %s229 = sld [smem:[#allocation2 + $0x4]]
        %s230 = sld [smem:[#allocation2 + $0x5]]
        %s231 = sld [smem:[#allocation2 + $0x6]]
        %s232 = sld [smem:[#allocation2 + $0x7]]
        %s233 = sld [smem:[#allocation2 + $0x8]]
        %s234 = sld [smem:[#allocation2 + $0x9]]
        %s235 = sld [smem:[#allocation2 + $0xa]]
        %s236 = sld [smem:[#allocation2 + $0xb]]
        %s237 = sld [smem:[#allocation2 + $0xc]]
        %s238 = sld [smem:[#allocation2 + $0xd]]
        %s239 = sld [smem:[#allocation2 + $0xe]]
        %s240 = sld [smem:[#allocation2 + $0xf]]
        %s241 = sld [smem:[#allocation2 + $0x10]]
        %s242 = sld [smem:[#allocation2 + $0x11]]
        %s243 = sld [smem:[#allocation2 + $0x12]]
        %s244 = sld [smem:[#allocation2 + $0x13]]
        %s245 = sld [smem:[#allocation2 + $0x14]]
        %s246 = sld [smem:[#allocation2 + $0x15]]
        %s247 = sld [smem:[#allocation2 + $0x16]]
        %s248 = sld [smem:[#allocation2 + $0x17]]
        %s249 = sld [smem:[#allocation2 + $0x18]]
        %s250 = sld [smem:[#allocation2 + $0x19]]
        %s251 = sld [smem:[#allocation2 + $0x1a]]
        %s252 = sld [smem:[#allocation2 + $0x1b]]
        %s253 = sld [smem:[#allocation2 + $0x1c]]
        %s254 = sld [smem:[#allocation2 + $0x1d]]
        %s255 = sld [smem:[#allocation2 + $0x1e]]
        %s256 = sld [smem:[#allocation2 + $0x1f]]
        %s257 = sld [smem:[#allocation2 + $0x20]]
        %s258 = sld [smem:[#allocation2 + $0x21]]
        %s259 = sld [smem:[#allocation2 + $0x22]]
        %s260 = sld [smem:[#allocation2 + $0x23]]
        %s261 = sld [smem:[#allocation2 + $0x24]]
        %s262 = sld [smem:[#allocation2 + $0x25]]
        %s263 = sld [smem:[#allocation2 + $0x26]]
        %s264 = sld [smem:[#allocation2 + $0x27]]
        %s265 = sld [smem:[#allocation2 + $0x28]]
        %s266 = sld [smem:[#allocation2 + $0x29]]
        %s267 = sld [smem:[#allocation2 + $0x2a]]
        %s268 = sld [smem:[#allocation2 + $0x2b]]
        %s269 = sld [smem:[#allocation2 + $0x2c]]
        %s270 = sld [smem:[#allocation2 + $0x2d]]
        %s271 = sld [smem:[#allocation2 + $0x2e]]
        %s272 = sld [smem:[#allocation2 + $0x2f]]
        %s273 = sld [smem:[#allocation5]]
        %s274 = sld [smem:[#allocation5 + $0x1]]
        %s275 = sld [smem:[#allocation5 + $0x2]]
        %s276 = sld [smem:[#allocation5 + $0x3]]
        %s277 = sld [smem:[#allocation5 + $0x4]]
        %s278 = sld [smem:[#allocation5 + $0x5]]
        %s279 = sld [smem:[#allocation5 + $0x6]]
        %s280 = sld [smem:[#allocation5 + $0x7]]
        %v281 = vstv %s273
        %v282 = vstv %s274
        %v283 = vstv %s275
        %v284 = vstv %s276
        %v285 = vstv %s277
        %v286 = vstv %s278
        %v287 = vstv %s279
        %v288 = vstv %s280
        %v289 = vld [vmem:[%s223] sm:$0xff]
        %v290 = vld [vmem:[%s223 + $0x8] sm:$0xff]
        %v291 = vld [vmem:[%s223 + $0x10] sm:$0xf]
        %v292 = vmul.f32 %v289, 0.5
        %v293 = vmul.f32 %v290, 0.5
        %v294 = vmul.f32 %v291, 0.5
        %v295 = vmul.f32 %v289, -1.0
        %v296 = vmul.f32 %v290, -1.0
        %v297 = vmul.f32 %v291, -1.0
        %301 = vrot.lane.b32.xlu0 %v295, 127
        %v302 = vpop.permute.xlu0 %301
        %303 = vrot.lane.b32.xlu0 %v296, 127
        %v304 = vpop.permute.xlu0 %303
        %305 = vrot.lane.b32.xlu0 %v297, 127
        %v306 = vpop.permute.xlu0 %305
        %v310 = vadd.f32 %v292, %v302
        %v311 = vadd.f32 %v293, %v304
        %v312 = vadd.f32 %v294, %v306
        %316 = vrot.lane.b32.xlu0 %v292, 126
        %v317 = vpop.permute.xlu0 %316
        %318 = vrot.lane.b32.xlu0 %v293, 126
        %v319 = vpop.permute.xlu0 %318
        %320 = vrot.lane.b32.xlu0 %v294, 126
        %v321 = vpop.permute.xlu0 %320
        %v325 = vadd.f32 %v310, %v317
        %v326 = vadd.f32 %v311, %v319
        %v327 = vadd.f32 %v312, %v321
        %vm331 = vcmask 1045504
        %v332 = vrot.slane %v325, 2
        %v333 = vrot.slane %v326, 2
        %v334 = vsel %vm331, %v332, %v333
        %v335 = vrot.slane %v327, 2
        %v336 = vsel %vm331, %v333, %v335
        %v340 = vadd.f32 %v325, %v334
        %v341 = vadd.f32 %v326, %v336
        %v342 = vadd.f32 %v327, %v335
        %v343 = vmul.f32 %v340, 0.5
        %v344 = vmul.f32 %v341, 0.5
        %v345 = vmul.f32 %v342, 0.5
        %vm349 = vcmask 1040384
        %v350 = vrot.slane %v343, 7
        %v351 = vrot.slane %v344, 7
        %v352 = vsel %vm349, %v350, %v351
        %v353 = vrot.slane %v345, 7
        %v354 = vsel %vm349, %v351, %v353
        %v358 = vsub.f32 %v325, %v350
        %v359 = vsub.f32 %v326, %v352
        %v360 = vsub.f32 %v327, %v354
        %v361 = vmax.f32 %v358, -3.0
        %v362 = vmax.f32 %v359, -3.0
        %v363 = vmax.f32 %v360, -3.0
        %v364 = vmin.f32 %v361, 3.0
        %v365 = vmin.f32 %v362, 3.0
        %v366 = vmin.f32 %v363, 3.0
        %v367 = vstv %s225
        %v368 = vmul.f32 %v364, %v367
        %v369 = vmul.f32 %v365, %v367
        %v370 = vmul.f32 %v366, %v367
        %v371 = vadd.f32 %v281, %v368
        %v372 = vadd.f32 %v281, %v369
        %v373 = vadd.f32 %v281, %v370
        %v374 = vstv %s231
        %v375 = vmul.f32 %v364, %v374
        %v376 = vmul.f32 %v365, %v374
        %v377 = vmul.f32 %v366, %v374
        %v378 = vadd.f32 %v282, %v375
        %v379 = vadd.f32 %v282, %v376
        %v380 = vadd.f32 %v282, %v377
        %v381 = vstv %s237
        %v382 = vmul.f32 %v364, %v381
        %v383 = vmul.f32 %v365, %v381
        %v384 = vmul.f32 %v366, %v381
        %v385 = vadd.f32 %v283, %v382
        %v386 = vadd.f32 %v283, %v383
        %v387 = vadd.f32 %v283, %v384
        %v388 = vstv %s243
        %v389 = vmul.f32 %v364, %v388
        %v390 = vmul.f32 %v365, %v388
        %v391 = vmul.f32 %v366, %v388
        %v392 = vadd.f32 %v284, %v389
        %v393 = vadd.f32 %v284, %v390
        %v394 = vadd.f32 %v284, %v391
        %v395 = vstv %s249
        %v396 = vmul.f32 %v364, %v395
        %v397 = vmul.f32 %v365, %v395
        %v398 = vmul.f32 %v366, %v395
        %v399 = vadd.f32 %v285, %v396
        %v400 = vadd.f32 %v285, %v397
        %v401 = vadd.f32 %v285, %v398
        %v402 = vstv %s255
        %v403 = vmul.f32 %v364, %v402
        %v404 = vmul.f32 %v365, %v402
        %v405 = vmul.f32 %v366, %v402
        %v406 = vadd.f32 %v286, %v403
        %v407 = vadd.f32 %v286, %v404
        %v408 = vadd.f32 %v286, %v405
        %v409 = vstv %s261
        %v410 = vmul.f32 %v364, %v409
        %v411 = vmul.f32 %v365, %v409
        %v412 = vmul.f32 %v366, %v409
        %v413 = vadd.f32 %v287, %v410
        %v414 = vadd.f32 %v287, %v411
        %v415 = vadd.f32 %v287, %v412
        %v416 = vstv %s267
        %v417 = vmul.f32 %v364, %v416
        %v418 = vmul.f32 %v365, %v416
        %v419 = vmul.f32 %v366, %v416
        %v420 = vadd.f32 %v288, %v417
        %v421 = vadd.f32 %v288, %v418
        %v422 = vadd.f32 %v288, %v419
        %s423 = scalar_lea.vmem %s223, 24
        %v424 = vld [vmem:[%s423] sm:$0xff]
        %v425 = vld [vmem:[%s423 + $0x8] sm:$0xff]
        %v426 = vld [vmem:[%s423 + $0x10] sm:$0xf]
        %v427 = vmul.f32 %v424, -0.083333336
        %v428 = vmul.f32 %v425, -0.083333336
        %v429 = vmul.f32 %v426, -0.083333336
        %v430 = vmul.f32 %v424, 0.16666667
        %v431 = vmul.f32 %v425, 0.16666667
        %v432 = vmul.f32 %v426, 0.16666667
        %v433 = vmul.f32 %v424, -0.16666667
        %v434 = vmul.f32 %v425, -0.16666667
        %v435 = vmul.f32 %v426, -0.16666667
        %439 = vrot.lane.b32.xlu0 %v430, 127
        %v440 = vpop.permute.xlu0 %439
        %441 = vrot.lane.b32.xlu0 %v431, 127
        %v442 = vpop.permute.xlu0 %441
        %443 = vrot.lane.b32.xlu0 %v432, 127
        %v444 = vpop.permute.xlu0 %443
        %v448 = vadd.f32 %v427, %v440
        %v449 = vadd.f32 %v428, %v442
        %v450 = vadd.f32 %v429, %v444
        %v451 = vmul.f32 %v424, -0.5
        %v452 = vmul.f32 %v425, -0.5
        %v453 = vmul.f32 %v426, -0.5
        %457 = vrot.lane.b32.xlu0 %v451, 127
        %v458 = vpop.permute.xlu0 %457
        %459 = vrot.lane.b32.xlu0 %v452, 127
        %v460 = vpop.permute.xlu0 %459
        %461 = vrot.lane.b32.xlu0 %v453, 127
        %v462 = vpop.permute.xlu0 %461
        %v466 = vadd.f32 %v430, %v458
        %v467 = vadd.f32 %v431, %v460
        %v468 = vadd.f32 %v432, %v462
        %v469 = vmul.f32 %v424, 0.6666667
        %v470 = vmul.f32 %v425, 0.6666667
        %v471 = vmul.f32 %v426, 0.6666667
        %475 = vrot.lane.b32.xlu0 %v469, 127
        %v476 = vpop.permute.xlu0 %475
        %477 = vrot.lane.b32.xlu0 %v470, 127
        %v478 = vpop.permute.xlu0 %477
        %479 = vrot.lane.b32.xlu0 %v471, 127
        %v480 = vpop.permute.xlu0 %479
        %v484 = vadd.f32 %v433, %v476
        %v485 = vadd.f32 %v434, %v478
        %v486 = vadd.f32 %v435, %v480
        %v487 = vmul.f32 %v424, 0.5
        %v488 = vmul.f32 %v425, 0.5
        %v489 = vmul.f32 %v426, 0.5
        %493 = vrot.lane.b32.xlu0 %v433, 126
        %v494 = vpop.permute.xlu0 %493
        %495 = vrot.lane.b32.xlu0 %v434, 126
        %v496 = vpop.permute.xlu0 %495
        %497 = vrot.lane.b32.xlu0 %v435, 126
        %v498 = vpop.permute.xlu0 %497
        %v502 = vadd.f32 %v448, %v494
        %v503 = vadd.f32 %v449, %v496
        %v504 = vadd.f32 %v450, %v498
        %505 = vrot.lane.b32.xlu0 %v469, 126
        %v506 = vpop.permute.xlu0 %505
        %507 = vrot.lane.b32.xlu0 %v470, 126
        %v508 = vpop.permute.xlu0 %507
        %509 = vrot.lane.b32.xlu0 %v471, 126
        %v510 = vpop.permute.xlu0 %509
        %v514 = vadd.f32 %v466, %v506
        %v515 = vadd.f32 %v467, %v508
        %v516 = vadd.f32 %v468, %v510
        %v517 = vmul.f32 %v424, -1.0
        %v518 = vmul.f32 %v425, -1.0
        %v519 = vmul.f32 %v426, -1.0
        %523 = vrot.lane.b32.xlu0 %v517, 126
        %v524 = vpop.permute.xlu0 %523
        %525 = vrot.lane.b32.xlu0 %v518, 126
        %v526 = vpop.permute.xlu0 %525
        %527 = vrot.lane.b32.xlu0 %v519, 126
        %v528 = vpop.permute.xlu0 %527
        %v532 = vadd.f32 %v484, %v524
        %v533 = vadd.f32 %v485, %v526
        %v534 = vadd.f32 %v486, %v528
        %535 = vrot.lane.b32.xlu0 %v517, 127
        %v536 = vpop.permute.xlu0 %535
        %537 = vrot.lane.b32.xlu0 %v518, 127
        %v538 = vpop.permute.xlu0 %537
        %539 = vrot.lane.b32.xlu0 %v519, 127
        %v540 = vpop.permute.xlu0 %539
        %v544 = vadd.f32 %v487, %v536
        %v545 = vadd.f32 %v488, %v538
        %v546 = vadd.f32 %v489, %v540
        %547 = vrot.lane.b32.xlu0 %v430, 125
        %v548 = vpop.permute.xlu0 %547
        %549 = vrot.lane.b32.xlu0 %v431, 125
        %v550 = vpop.permute.xlu0 %549
        %551 = vrot.lane.b32.xlu0 %v432, 125
        %v552 = vpop.permute.xlu0 %551
        %v556 = vadd.f32 %v502, %v548
        %v557 = vadd.f32 %v503, %v550
        %v558 = vadd.f32 %v504, %v552
        %559 = vrot.lane.b32.xlu0 %v451, 125
        %v560 = vpop.permute.xlu0 %559
        %561 = vrot.lane.b32.xlu0 %v452, 125
        %v562 = vpop.permute.xlu0 %561
        %563 = vrot.lane.b32.xlu0 %v453, 125
        %v564 = vpop.permute.xlu0 %563
        %v568 = vadd.f32 %v514, %v560
        %v569 = vadd.f32 %v515, %v562
        %v570 = vadd.f32 %v516, %v564
        %571 = vrot.lane.b32.xlu0 %v469, 125
        %v572 = vpop.permute.xlu0 %571
        %573 = vrot.lane.b32.xlu0 %v470, 125
        %v574 = vpop.permute.xlu0 %573
        %575 = vrot.lane.b32.xlu0 %v471, 125
        %v576 = vpop.permute.xlu0 %575
        %v580 = vadd.f32 %v532, %v572
        %v581 = vadd.f32 %v533, %v574
        %v582 = vadd.f32 %v534, %v576
        %586 = vrot.lane.b32.xlu0 %v487, 126
        %v587 = vpop.permute.xlu0 %586
        %588 = vrot.lane.b32.xlu0 %v488, 126
        %v589 = vpop.permute.xlu0 %588
        %590 = vrot.lane.b32.xlu0 %v489, 126
        %v591 = vpop.permute.xlu0 %590
        %v595 = vadd.f32 %v544, %v587
        %v596 = vadd.f32 %v545, %v589
        %v597 = vadd.f32 %v546, %v591
        %601 = vrot.lane.b32.xlu0 %v427, 124
        %v602 = vpop.permute.xlu0 %601
        %603 = vrot.lane.b32.xlu0 %v428, 124
        %v604 = vpop.permute.xlu0 %603
        %605 = vrot.lane.b32.xlu0 %v429, 124
        %v606 = vpop.permute.xlu0 %605
        %v610 = vadd.f32 %v556, %v602
        %v611 = vadd.f32 %v557, %v604
        %v612 = vadd.f32 %v558, %v606
        %613 = vrot.lane.b32.xlu0 %v430, 124
        %v614 = vpop.permute.xlu0 %613
        %615 = vrot.lane.b32.xlu0 %v431, 124
        %v616 = vpop.permute.xlu0 %615
        %617 = vrot.lane.b32.xlu0 %v432, 124
        %v618 = vpop.permute.xlu0 %617
        %v622 = vadd.f32 %v568, %v614
        %v623 = vadd.f32 %v569, %v616
        %v624 = vadd.f32 %v570, %v618
        %625 = vrot.lane.b32.xlu0 %v433, 124
        %v626 = vpop.permute.xlu0 %625
        %627 = vrot.lane.b32.xlu0 %v434, 124
        %v628 = vpop.permute.xlu0 %627
        %629 = vrot.lane.b32.xlu0 %v435, 124
        %v630 = vpop.permute.xlu0 %629
        %v634 = vadd.f32 %v580, %v626
        %v635 = vadd.f32 %v581, %v628
        %v636 = vadd.f32 %v582, %v630
        %v640 = vrot.slane %v595, 2
        %v641 = vrot.slane %v596, 2
        %v642 = vsel %vm331, %v640, %v641
        %v643 = vrot.slane %v597, 2
        %v644 = vsel %vm331, %v641, %v643
        %v648 = vadd.f32 %v595, %v642
        %v649 = vadd.f32 %v596, %v644
        %v650 = vadd.f32 %v597, %v643
        %v651 = vmul.f32 %v648, 0.5
        %v652 = vmul.f32 %v649, 0.5
        %v653 = vmul.f32 %v650, 0.5
        %v657 = vrot.slane %v651, 7
        %v658 = vrot.slane %v652, 7
        %v659 = vsel %vm349, %v657, %v658
        %v660 = vrot.slane %v653, 7
        %v661 = vsel %vm349, %v658, %v660
        %v665 = vsub.f32 %v595, %v657
        %v666 = vsub.f32 %v596, %v659
        %v667 = vsub.f32 %v597, %v661
        %vm671 = vcmask 1043456
        %v672 = vrot.slane %v610, 4
        %v673 = vrot.slane %v611, 4
        %v674 = vsel %vm671, %v672, %v673
        %v675 = vrot.slane %v612, 4
        %v676 = vsel %vm671, %v673, %v675
        %v679 = vadd.f32 %v610, %v674
        %v680 = vadd.f32 %v611, %v676
        %vm684 = vcmask 1046528
        %v685 = vrot.slane %v622, 1
        %v686 = vrot.slane %v623, 1
        %v687 = vsel %vm684, %v685, %v686
        %v688 = vrot.slane %v624, 1
        %v689 = vsel %vm684, %v686, %v688
        %v692 = vadd.f32 %v679, %v687
        %v693 = vadd.f32 %v680, %v689
        %vm694 = vcmask 1044480
        %v695 = vrot.slane %v622, 3
        %v696 = vrot.slane %v623, 3
        %v697 = vsel %vm694, %v695, %v696
        %v698 = vrot.slane %v624, 3
        %v699 = vsel %vm694, %v696, %v698
        %v702 = vadd.f32 %v692, %v697
        %v703 = vadd.f32 %v693, %v699
        %v707 = vrot.slane %v634, 2
        %v708 = vrot.slane %v635, 2
        %v709 = vsel %vm331, %v707, %v708
        %v710 = vrot.slane %v636, 2
        %v711 = vsel %vm331, %v708, %v710
        %v714 = vadd.f32 %v702, %v709
        %v715 = vadd.f32 %v703, %v711
        %v716 = vmax.f32 %v665, -3.0
        %v717 = vmax.f32 %v666, -3.0
        %v718 = vmax.f32 %v667, -3.0
        %v719 = vmin.f32 %v716, 3.0
        %v720 = vmin.f32 %v717, 3.0
        %v721 = vmin.f32 %v718, 3.0
        %v722 = vstv %s226
        %v723 = vmul.f32 %v719, %v722
        %v724 = vmul.f32 %v720, %v722
        %v725 = vmul.f32 %v721, %v722
        %v726 = vadd.f32 %v371, %v723
        %v727 = vadd.f32 %v372, %v724
        %v728 = vadd.f32 %v373, %v725
        %v729 = vstv %s232
        %v730 = vmul.f32 %v719, %v729
        %v731 = vmul.f32 %v720, %v729
        %v732 = vmul.f32 %v721, %v729
        %v733 = vadd.f32 %v378, %v730
        %v734 = vadd.f32 %v379, %v731
        %v735 = vadd.f32 %v380, %v732
        %v736 = vstv %s238
        %v737 = vmul.f32 %v719, %v736
        %v738 = vmul.f32 %v720, %v736
        %v739 = vmul.f32 %v721, %v736
        %v740 = vadd.f32 %v385, %v737
        %v741 = vadd.f32 %v386, %v738
        %v742 = vadd.f32 %v387, %v739
        %v743 = vstv %s244
        %v744 = vmul.f32 %v719, %v743
        %v745 = vmul.f32 %v720, %v743
        %v746 = vmul.f32 %v721, %v743
        %v747 = vadd.f32 %v392, %v744
        %v748 = vadd.f32 %v393, %v745
        %v749 = vadd.f32 %v394, %v746
        %v750 = vstv %s250
        %v751 = vmul.f32 %v719, %v750
        %v752 = vmul.f32 %v720, %v750
        %v753 = vmul.f32 %v721, %v750
        %v754 = vadd.f32 %v399, %v751
        %v755 = vadd.f32 %v400, %v752
        %v756 = vadd.f32 %v401, %v753
        %v757 = vstv %s256
        %v758 = vmul.f32 %v719, %v757
        %v759 = vmul.f32 %v720, %v757
        %v760 = vmul.f32 %v721, %v757
        %v761 = vadd.f32 %v406, %v758
        %v762 = vadd.f32 %v407, %v759
        %v763 = vadd.f32 %v408, %v760
        %v764 = vstv %s262
        %v765 = vmul.f32 %v719, %v764
        %v766 = vmul.f32 %v720, %v764
        %v767 = vmul.f32 %v721, %v764
        %v768 = vadd.f32 %v413, %v765
        %v769 = vadd.f32 %v414, %v766
        %v770 = vadd.f32 %v415, %v767
        %v771 = vstv %s268
        %v772 = vmul.f32 %v719, %v771
        %v773 = vmul.f32 %v720, %v771
        %v774 = vmul.f32 %v721, %v771
        %v775 = vadd.f32 %v420, %v772
        %v776 = vadd.f32 %v421, %v773
        %v777 = vadd.f32 %v422, %v774
        %v778 = vmax.f32 %v714, -3.0
        %v779 = vmax.f32 %v715, -3.0
        %v780 = vmin.f32 %v778, 3.0
        %v781 = vmin.f32 %v779, 3.0
        %v782 = vstv %s227
        %v783 = vmul.f32 %v780, %v782
        %v784 = vmul.f32 %v781, %v782
        %vm787 = vcmask 1041408
        %v788 = vrot.slane %v783, 6
        %v789 = vrot.slane %v784, 6
        %v790 = vsel %vm787, %v788, %v789
        %791 = vrot.lane.b32.xlu0 %v788, 1
        %v792 = vpop.permute.xlu0 %791
        %793 = vrot.lane.b32.xlu0 %v790, 1
        %v794 = vpop.permute.xlu0 %793
        %795 = vrot.lane.b32.xlu0 %v789, 1
        %v796 = vpop.permute.xlu0 %795
        %v800 = vadd.f32 %v726, %v792
        %v801 = vadd.f32 %v727, %v794
        %v802 = vadd.f32 %v728, %v796
        %v803 = vstv %s233
        %v804 = vmul.f32 %v780, %v803
        %v805 = vmul.f32 %v781, %v803
        %v808 = vrot.slane %v804, 6
        %v809 = vrot.slane %v805, 6
        %v810 = vsel %vm787, %v808, %v809
        %811 = vrot.lane.b32.xlu0 %v808, 1
        %v812 = vpop.permute.xlu0 %811
        %813 = vrot.lane.b32.xlu0 %v810, 1
        %v814 = vpop.permute.xlu0 %813
        %815 = vrot.lane.b32.xlu0 %v809, 1
        %v816 = vpop.permute.xlu0 %815
        %v820 = vadd.f32 %v733, %v812
        %v821 = vadd.f32 %v734, %v814
        %v822 = vadd.f32 %v735, %v816
        %v823 = vstv %s239
        %v824 = vmul.f32 %v780, %v823
        %v825 = vmul.f32 %v781, %v823
        %v828 = vrot.slane %v824, 6
        %v829 = vrot.slane %v825, 6
        %v830 = vsel %vm787, %v828, %v829
        %831 = vrot.lane.b32.xlu0 %v828, 1
        %v832 = vpop.permute.xlu0 %831
        %833 = vrot.lane.b32.xlu0 %v830, 1
        %v834 = vpop.permute.xlu0 %833
        %835 = vrot.lane.b32.xlu0 %v829, 1
        %v836 = vpop.permute.xlu0 %835
        %v840 = vadd.f32 %v740, %v832
        %v841 = vadd.f32 %v741, %v834
        %v842 = vadd.f32 %v742, %v836
        %v843 = vstv %s245
        %v844 = vmul.f32 %v780, %v843
        %v845 = vmul.f32 %v781, %v843
        %v848 = vrot.slane %v844, 6
        %v849 = vrot.slane %v845, 6
        %v850 = vsel %vm787, %v848, %v849
        %851 = vrot.lane.b32.xlu0 %v848, 1
        %v852 = vpop.permute.xlu0 %851
        %853 = vrot.lane.b32.xlu0 %v850, 1
        %v854 = vpop.permute.xlu0 %853
        %855 = vrot.lane.b32.xlu0 %v849, 1
        %v856 = vpop.permute.xlu0 %855
        %v860 = vadd.f32 %v747, %v852
        %v861 = vadd.f32 %v748, %v854
        %v862 = vadd.f32 %v749, %v856
        %v863 = vstv %s251
        %v864 = vmul.f32 %v780, %v863
        %v865 = vmul.f32 %v781, %v863
        %v868 = vrot.slane %v864, 6
        %v869 = vrot.slane %v865, 6
        %v870 = vsel %vm787, %v868, %v869
        %871 = vrot.lane.b32.xlu0 %v868, 1
        %v872 = vpop.permute.xlu0 %871
        %873 = vrot.lane.b32.xlu0 %v870, 1
        %v874 = vpop.permute.xlu0 %873
        %875 = vrot.lane.b32.xlu0 %v869, 1
        %v876 = vpop.permute.xlu0 %875
        %v880 = vadd.f32 %v754, %v872
        %v881 = vadd.f32 %v755, %v874
        %v882 = vadd.f32 %v756, %v876
        %v883 = vstv %s257
        %v884 = vmul.f32 %v780, %v883
        %v885 = vmul.f32 %v781, %v883
        %v888 = vrot.slane %v884, 6
        %v889 = vrot.slane %v885, 6
        %v890 = vsel %vm787, %v888, %v889
        %891 = vrot.lane.b32.xlu0 %v888, 1
        %v892 = vpop.permute.xlu0 %891
        %893 = vrot.lane.b32.xlu0 %v890, 1
        %v894 = vpop.permute.xlu0 %893
        %895 = vrot.lane.b32.xlu0 %v889, 1
        %v896 = vpop.permute.xlu0 %895
        %v900 = vadd.f32 %v761, %v892
        %v901 = vadd.f32 %v762, %v894
        %v902 = vadd.f32 %v763, %v896
        %v903 = vstv %s263
        %v904 = vmul.f32 %v780, %v903
        %v905 = vmul.f32 %v781, %v903
        %v908 = vrot.slane %v904, 6
        %v909 = vrot.slane %v905, 6
        %v910 = vsel %vm787, %v908, %v909
        %911 = vrot.lane.b32.xlu0 %v908, 1
        %v912 = vpop.permute.xlu0 %911
        %913 = vrot.lane.b32.xlu0 %v910, 1
        %v914 = vpop.permute.xlu0 %913
        %915 = vrot.lane.b32.xlu0 %v909, 1
        %v916 = vpop.permute.xlu0 %915
        %v920 = vadd.f32 %v768, %v912
        %v921 = vadd.f32 %v769, %v914
        %v922 = vadd.f32 %v770, %v916
        %v923 = vstv %s269
        %v924 = vmul.f32 %v780, %v923
        %v925 = vmul.f32 %v781, %v923
        %v928 = vrot.slane %v924, 6
        %v929 = vrot.slane %v925, 6
        %v930 = vsel %vm787, %v928, %v929
        %931 = vrot.lane.b32.xlu0 %v928, 1
        %v932 = vpop.permute.xlu0 %931
        %933 = vrot.lane.b32.xlu0 %v930, 1
        %v934 = vpop.permute.xlu0 %933
        %935 = vrot.lane.b32.xlu0 %v929, 1
        %v936 = vpop.permute.xlu0 %935
        %v940 = vadd.f32 %v775, %v932
        %v941 = vadd.f32 %v776, %v934
        %v942 = vadd.f32 %v777, %v936
        %s943 = scalar_lea.vmem %s223, 48
        %v944 = vld [vmem:[%s943] sm:$0xff]
        %v945 = vld [vmem:[%s943 + $0x8] sm:$0xff]
        %v946 = vld [vmem:[%s943 + $0x10] sm:$0xf]
        %v947 = vmul.f32 %v944, -0.083333336
        %v948 = vmul.f32 %v945, -0.083333336
        %v949 = vmul.f32 %v946, -0.083333336
        %v950 = vmul.f32 %v944, 0.16666667
        %v951 = vmul.f32 %v945, 0.16666667
        %v952 = vmul.f32 %v946, 0.16666667
        %v953 = vmul.f32 %v944, -0.16666667
        %v954 = vmul.f32 %v945, -0.16666667
        %v955 = vmul.f32 %v946, -0.16666667
        %959 = vrot.lane.b32.xlu0 %v950, 127
        %v960 = vpop.permute.xlu0 %959
        %961 = vrot.lane.b32.xlu0 %v951, 127
        %v962 = vpop.permute.xlu0 %961
        %963 = vrot.lane.b32.xlu0 %v952, 127
        %v964 = vpop.permute.xlu0 %963
        %v968 = vadd.f32 %v947, %v960
        %v969 = vadd.f32 %v948, %v962
        %v970 = vadd.f32 %v949, %v964
        %v971 = vmul.f32 %v944, -0.5
        %v972 = vmul.f32 %v945, -0.5
        %v973 = vmul.f32 %v946, -0.5
        %977 = vrot.lane.b32.xlu0 %v971, 127
        %v978 = vpop.permute.xlu0 %977
        %979 = vrot.lane.b32.xlu0 %v972, 127
        %v980 = vpop.permute.xlu0 %979
        %981 = vrot.lane.b32.xlu0 %v973, 127
        %v982 = vpop.permute.xlu0 %981
        %v986 = vadd.f32 %v950, %v978
        %v987 = vadd.f32 %v951, %v980
        %v988 = vadd.f32 %v952, %v982
        %v989 = vmul.f32 %v944, 0.6666667
        %v990 = vmul.f32 %v945, 0.6666667
        %v991 = vmul.f32 %v946, 0.6666667
        %995 = vrot.lane.b32.xlu0 %v989, 127
        %v996 = vpop.permute.xlu0 %995
        %997 = vrot.lane.b32.xlu0 %v990, 127
        %v998 = vpop.permute.xlu0 %997
        %999 = vrot.lane.b32.xlu0 %v991, 127
        %v1000 = vpop.permute.xlu0 %999
        %v1004 = vadd.f32 %v953, %v996
        %v1005 = vadd.f32 %v954, %v998
        %v1006 = vadd.f32 %v955, %v1000
        %v1007 = vmul.f32 %v944, 0.5
        %v1008 = vmul.f32 %v945, 0.5
        %v1009 = vmul.f32 %v946, 0.5
        %1013 = vrot.lane.b32.xlu0 %v953, 126
        %v1014 = vpop.permute.xlu0 %1013
        %1015 = vrot.lane.b32.xlu0 %v954, 126
        %v1016 = vpop.permute.xlu0 %1015
        %1017 = vrot.lane.b32.xlu0 %v955, 126
        %v1018 = vpop.permute.xlu0 %1017
        %v1022 = vadd.f32 %v968, %v1014
        %v1023 = vadd.f32 %v969, %v1016
        %v1024 = vadd.f32 %v970, %v1018
        %1025 = vrot.lane.b32.xlu0 %v989, 126
        %v1026 = vpop.permute.xlu0 %1025
        %1027 = vrot.lane.b32.xlu0 %v990, 126
        %v1028 = vpop.permute.xlu0 %1027
        %1029 = vrot.lane.b32.xlu0 %v991, 126
        %v1030 = vpop.permute.xlu0 %1029
        %v1034 = vadd.f32 %v986, %v1026
        %v1035 = vadd.f32 %v987, %v1028
        %v1036 = vadd.f32 %v988, %v1030
        %v1037 = vmul.f32 %v944, -1.0
        %v1038 = vmul.f32 %v945, -1.0
        %v1039 = vmul.f32 %v946, -1.0
        %1043 = vrot.lane.b32.xlu0 %v1037, 126
        %v1044 = vpop.permute.xlu0 %1043
        %1045 = vrot.lane.b32.xlu0 %v1038, 126
        %v1046 = vpop.permute.xlu0 %1045
        %1047 = vrot.lane.b32.xlu0 %v1039, 126
        %v1048 = vpop.permute.xlu0 %1047
        %v1052 = vadd.f32 %v1004, %v1044
        %v1053 = vadd.f32 %v1005, %v1046
        %v1054 = vadd.f32 %v1006, %v1048
        %1055 = vrot.lane.b32.xlu0 %v1037, 127
        %v1056 = vpop.permute.xlu0 %1055
        %1057 = vrot.lane.b32.xlu0 %v1038, 127
        %v1058 = vpop.permute.xlu0 %1057
        %1059 = vrot.lane.b32.xlu0 %v1039, 127
        %v1060 = vpop.permute.xlu0 %1059
        %v1064 = vadd.f32 %v1007, %v1056
        %v1065 = vadd.f32 %v1008, %v1058
        %v1066 = vadd.f32 %v1009, %v1060
        %1067 = vrot.lane.b32.xlu0 %v950, 125
        %v1068 = vpop.permute.xlu0 %1067
        %1069 = vrot.lane.b32.xlu0 %v951, 125
        %v1070 = vpop.permute.xlu0 %1069
        %1071 = vrot.lane.b32.xlu0 %v952, 125
        %v1072 = vpop.permute.xlu0 %1071
        %v1076 = vadd.f32 %v1022, %v1068
        %v1077 = vadd.f32 %v1023, %v1070
        %v1078 = vadd.f32 %v1024, %v1072
        %1079 = vrot.lane.b32.xlu0 %v971, 125
        %v1080 = vpop.permute.xlu0 %1079
        %1081 = vrot.lane.b32.xlu0 %v972, 125
        %v1082 = vpop.permute.xlu0 %1081
        %1083 = vrot.lane.b32.xlu0 %v973, 125
        %v1084 = vpop.permute.xlu0 %1083
        %v1088 = vadd.f32 %v1034, %v1080
        %v1089 = vadd.f32 %v1035, %v1082
        %v1090 = vadd.f32 %v1036, %v1084
        %1091 = vrot.lane.b32.xlu0 %v989, 125
        %v1092 = vpop.permute.xlu0 %1091
        %1093 = vrot.lane.b32.xlu0 %v990, 125
        %v1094 = vpop.permute.xlu0 %1093
        %1095 = vrot.lane.b32.xlu0 %v991, 125
        %v1096 = vpop.permute.xlu0 %1095
        %v1100 = vadd.f32 %v1052, %v1092
        %v1101 = vadd.f32 %v1053, %v1094
        %v1102 = vadd.f32 %v1054, %v1096
        %1106 = vrot.lane.b32.xlu0 %v1007, 126
        %v1107 = vpop.permute.xlu0 %1106
        %1108 = vrot.lane.b32.xlu0 %v1008, 126
        %v1109 = vpop.permute.xlu0 %1108
        %1110 = vrot.lane.b32.xlu0 %v1009, 126
        %v1111 = vpop.permute.xlu0 %1110
        %v1115 = vadd.f32 %v1064, %v1107
        %v1116 = vadd.f32 %v1065, %v1109
        %v1117 = vadd.f32 %v1066, %v1111
        %1121 = vrot.lane.b32.xlu0 %v947, 124
        %v1122 = vpop.permute.xlu0 %1121
        %1123 = vrot.lane.b32.xlu0 %v948, 124
        %v1124 = vpop.permute.xlu0 %1123
        %1125 = vrot.lane.b32.xlu0 %v949, 124
        %v1126 = vpop.permute.xlu0 %1125
        %v1130 = vadd.f32 %v1076, %v1122
        %v1131 = vadd.f32 %v1077, %v1124
        %v1132 = vadd.f32 %v1078, %v1126
        %1133 = vrot.lane.b32.xlu0 %v950, 124
        %v1134 = vpop.permute.xlu0 %1133
        %1135 = vrot.lane.b32.xlu0 %v951, 124
        %v1136 = vpop.permute.xlu0 %1135
        %1137 = vrot.lane.b32.xlu0 %v952, 124
        %v1138 = vpop.permute.xlu0 %1137
        %v1142 = vadd.f32 %v1088, %v1134
        %v1143 = vadd.f32 %v1089, %v1136
        %v1144 = vadd.f32 %v1090, %v1138
        %1145 = vrot.lane.b32.xlu0 %v953, 124
        %v1146 = vpop.permute.xlu0 %1145
        %1147 = vrot.lane.b32.xlu0 %v954, 124
        %v1148 = vpop.permute.xlu0 %1147
        %1149 = vrot.lane.b32.xlu0 %v955, 124
        %v1150 = vpop.permute.xlu0 %1149
        %v1154 = vadd.f32 %v1100, %v1146
        %v1155 = vadd.f32 %v1101, %v1148
        %v1156 = vadd.f32 %v1102, %v1150
        %v1160 = vrot.slane %v1130, 4
        %v1161 = vrot.slane %v1131, 4
        %v1162 = vsel %vm671, %v1160, %v1161
        %v1163 = vrot.slane %v1132, 4
        %v1164 = vsel %vm671, %v1161, %v1163
        %v1167 = vadd.f32 %v1130, %v1162
        %v1168 = vadd.f32 %v1131, %v1164
        %v1172 = vrot.slane %v1142, 1
        %v1173 = vrot.slane %v1143, 1
        %v1174 = vsel %vm684, %v1172, %v1173
        %v1175 = vrot.slane %v1144, 1
        %v1176 = vsel %vm684, %v1173, %v1175
        %v1179 = vadd.f32 %v1167, %v1174
        %v1180 = vadd.f32 %v1168, %v1176
        %v1181 = vrot.slane %v1142, 3
        %v1182 = vrot.slane %v1143, 3
        %v1183 = vsel %vm694, %v1181, %v1182
        %v1184 = vrot.slane %v1144, 3
        %v1185 = vsel %vm694, %v1182, %v1184
        %v1188 = vadd.f32 %v1179, %v1183
        %v1189 = vadd.f32 %v1180, %v1185
        %v1193 = vrot.slane %v1154, 2
        %v1194 = vrot.slane %v1155, 2
        %v1195 = vsel %vm331, %v1193, %v1194
        %v1196 = vrot.slane %v1156, 2
        %v1197 = vsel %vm331, %v1194, %v1196
        %v1200 = vadd.f32 %v1188, %v1195
        %v1201 = vadd.f32 %v1189, %v1197
        %v1202 = vmax.f32 %v1200, -3.0
        %v1203 = vmax.f32 %v1201, -3.0
        %v1204 = vmin.f32 %v1202, 3.0
        %v1205 = vmin.f32 %v1203, 3.0
        %v1206 = vstv %s228
        %v1207 = vmul.f32 %v1204, %v1206
        %v1208 = vmul.f32 %v1205, %v1206
        %v1211 = vrot.slane %v1207, 6
        %v1212 = vrot.slane %v1208, 6
        %v1213 = vsel %vm787, %v1211, %v1212
        %1214 = vrot.lane.b32.xlu0 %v1211, 1
        %v1215 = vpop.permute.xlu0 %1214
        %1216 = vrot.lane.b32.xlu0 %v1213, 1
        %v1217 = vpop.permute.xlu0 %1216
        %1218 = vrot.lane.b32.xlu0 %v1212, 1
        %v1219 = vpop.permute.xlu0 %1218
        %v1223 = vadd.f32 %v800, %v1215
        %v1224 = vadd.f32 %v801, %v1217
        %v1225 = vadd.f32 %v802, %v1219
        %v1226 = vstv %s234
        %v1227 = vmul.f32 %v1204, %v1226
        %v1228 = vmul.f32 %v1205, %v1226
        %v1231 = vrot.slane %v1227, 6
        %v1232 = vrot.slane %v1228, 6
        %v1233 = vsel %vm787, %v1231, %v1232
        %1234 = vrot.lane.b32.xlu0 %v1231, 1
        %v1235 = vpop.permute.xlu0 %1234
        %1236 = vrot.lane.b32.xlu0 %v1233, 1
        %v1237 = vpop.permute.xlu0 %1236
        %1238 = vrot.lane.b32.xlu0 %v1232, 1
        %v1239 = vpop.permute.xlu0 %1238
        %v1243 = vadd.f32 %v820, %v1235
        %v1244 = vadd.f32 %v821, %v1237
        %v1245 = vadd.f32 %v822, %v1239
        %v1246 = vstv %s240
        %v1247 = vmul.f32 %v1204, %v1246
        %v1248 = vmul.f32 %v1205, %v1246
        %v1251 = vrot.slane %v1247, 6
        %v1252 = vrot.slane %v1248, 6
        %v1253 = vsel %vm787, %v1251, %v1252
        %1254 = vrot.lane.b32.xlu0 %v1251, 1
        %v1255 = vpop.permute.xlu0 %1254
        %1256 = vrot.lane.b32.xlu0 %v1253, 1
        %v1257 = vpop.permute.xlu0 %1256
        %1258 = vrot.lane.b32.xlu0 %v1252, 1
        %v1259 = vpop.permute.xlu0 %1258
        %v1263 = vadd.f32 %v840, %v1255
        %v1264 = vadd.f32 %v841, %v1257
        %v1265 = vadd.f32 %v842, %v1259
        %v1266 = vstv %s246
        %v1267 = vmul.f32 %v1204, %v1266
        %v1268 = vmul.f32 %v1205, %v1266
        %v1271 = vrot.slane %v1267, 6
        %v1272 = vrot.slane %v1268, 6
        %v1273 = vsel %vm787, %v1271, %v1272
        %1274 = vrot.lane.b32.xlu0 %v1271, 1
        %v1275 = vpop.permute.xlu0 %1274
        %1276 = vrot.lane.b32.xlu0 %v1273, 1
        %v1277 = vpop.permute.xlu0 %1276
        %1278 = vrot.lane.b32.xlu0 %v1272, 1
        %v1279 = vpop.permute.xlu0 %1278
        %v1283 = vadd.f32 %v860, %v1275
        %v1284 = vadd.f32 %v861, %v1277
        %v1285 = vadd.f32 %v862, %v1279
        %v1286 = vstv %s252
        %v1287 = vmul.f32 %v1204, %v1286
        %v1288 = vmul.f32 %v1205, %v1286
        %v1291 = vrot.slane %v1287, 6
        %v1292 = vrot.slane %v1288, 6
        %v1293 = vsel %vm787, %v1291, %v1292
        %1294 = vrot.lane.b32.xlu0 %v1291, 1
        %v1295 = vpop.permute.xlu0 %1294
        %1296 = vrot.lane.b32.xlu0 %v1293, 1
        %v1297 = vpop.permute.xlu0 %1296
        %1298 = vrot.lane.b32.xlu0 %v1292, 1
        %v1299 = vpop.permute.xlu0 %1298
        %v1303 = vadd.f32 %v880, %v1295
        %v1304 = vadd.f32 %v881, %v1297
        %v1305 = vadd.f32 %v882, %v1299
        %v1306 = vstv %s258
        %v1307 = vmul.f32 %v1204, %v1306
        %v1308 = vmul.f32 %v1205, %v1306
        %v1311 = vrot.slane %v1307, 6
        %v1312 = vrot.slane %v1308, 6
        %v1313 = vsel %vm787, %v1311, %v1312
        %1314 = vrot.lane.b32.xlu0 %v1311, 1
        %v1315 = vpop.permute.xlu0 %1314
        %1316 = vrot.lane.b32.xlu0 %v1313, 1
        %v1317 = vpop.permute.xlu0 %1316
        %1318 = vrot.lane.b32.xlu0 %v1312, 1
        %v1319 = vpop.permute.xlu0 %1318
        %v1323 = vadd.f32 %v900, %v1315
        %v1324 = vadd.f32 %v901, %v1317
        %v1325 = vadd.f32 %v902, %v1319
        %v1326 = vstv %s264
        %v1327 = vmul.f32 %v1204, %v1326
        %v1328 = vmul.f32 %v1205, %v1326
        %v1331 = vrot.slane %v1327, 6
        %v1332 = vrot.slane %v1328, 6
        %v1333 = vsel %vm787, %v1331, %v1332
        %1334 = vrot.lane.b32.xlu0 %v1331, 1
        %v1335 = vpop.permute.xlu0 %1334
        %1336 = vrot.lane.b32.xlu0 %v1333, 1
        %v1337 = vpop.permute.xlu0 %1336
        %1338 = vrot.lane.b32.xlu0 %v1332, 1
        %v1339 = vpop.permute.xlu0 %1338
        %v1343 = vadd.f32 %v920, %v1335
        %v1344 = vadd.f32 %v921, %v1337
        %v1345 = vadd.f32 %v922, %v1339
        %v1346 = vstv %s270
        %v1347 = vmul.f32 %v1204, %v1346
        %v1348 = vmul.f32 %v1205, %v1346
        %v1351 = vrot.slane %v1347, 6
        %v1352 = vrot.slane %v1348, 6
        %v1353 = vsel %vm787, %v1351, %v1352
        %1354 = vrot.lane.b32.xlu0 %v1351, 1
        %v1355 = vpop.permute.xlu0 %1354
        %1356 = vrot.lane.b32.xlu0 %v1353, 1
        %v1357 = vpop.permute.xlu0 %1356
        %1358 = vrot.lane.b32.xlu0 %v1352, 1
        %v1359 = vpop.permute.xlu0 %1358
        %v1363 = vadd.f32 %v940, %v1355
        %v1364 = vadd.f32 %v941, %v1357
        %v1365 = vadd.f32 %v942, %v1359
        %v1366 = vmax.f32 %v1115, -3.0
        %v1367 = vmax.f32 %v1116, -3.0
        %v1368 = vmax.f32 %v1117, -3.0
        %v1369 = vmin.f32 %v1366, 3.0
        %v1370 = vmin.f32 %v1367, 3.0
        %v1371 = vmin.f32 %v1368, 3.0
        %v1372 = vstv %s229
        %v1373 = vmul.f32 %v1369, %v1372
        %v1374 = vmul.f32 %v1370, %v1372
        %v1375 = vmul.f32 %v1371, %v1372
        %v1376 = vadd.f32 %v1223, %v1373
        %v1377 = vadd.f32 %v1224, %v1374
        %v1378 = vadd.f32 %v1225, %v1375
        %v1379 = vstv %s235
        %v1380 = vmul.f32 %v1369, %v1379
        %v1381 = vmul.f32 %v1370, %v1379
        %v1382 = vmul.f32 %v1371, %v1379
        %v1383 = vadd.f32 %v1243, %v1380
        %v1384 = vadd.f32 %v1244, %v1381
        %v1385 = vadd.f32 %v1245, %v1382
        %v1386 = vstv %s241
        %v1387 = vmul.f32 %v1369, %v1386
        %v1388 = vmul.f32 %v1370, %v1386
        %v1389 = vmul.f32 %v1371, %v1386
        %v1390 = vadd.f32 %v1263, %v1387
        %v1391 = vadd.f32 %v1264, %v1388
        %v1392 = vadd.f32 %v1265, %v1389
        %v1393 = vstv %s247
        %v1394 = vmul.f32 %v1369, %v1393
        %v1395 = vmul.f32 %v1370, %v1393
        %v1396 = vmul.f32 %v1371, %v1393
        %v1397 = vadd.f32 %v1283, %v1394
        %v1398 = vadd.f32 %v1284, %v1395
        %v1399 = vadd.f32 %v1285, %v1396
        %v1400 = vstv %s253
        %v1401 = vmul.f32 %v1369, %v1400
        %v1402 = vmul.f32 %v1370, %v1400
        %v1403 = vmul.f32 %v1371, %v1400
        %v1404 = vadd.f32 %v1303, %v1401
        %v1405 = vadd.f32 %v1304, %v1402
        %v1406 = vadd.f32 %v1305, %v1403
        %v1407 = vstv %s259
        %v1408 = vmul.f32 %v1369, %v1407
        %v1409 = vmul.f32 %v1370, %v1407
        %v1410 = vmul.f32 %v1371, %v1407
        %v1411 = vadd.f32 %v1323, %v1408
        %v1412 = vadd.f32 %v1324, %v1409
        %v1413 = vadd.f32 %v1325, %v1410
        %v1414 = vstv %s265
        %v1415 = vmul.f32 %v1369, %v1414
        %v1416 = vmul.f32 %v1370, %v1414
        %v1417 = vmul.f32 %v1371, %v1414
        %v1418 = vadd.f32 %v1343, %v1415
        %v1419 = vadd.f32 %v1344, %v1416
        %v1420 = vadd.f32 %v1345, %v1417
        %v1421 = vstv %s271
        %v1422 = vmul.f32 %v1369, %v1421
        %v1423 = vmul.f32 %v1370, %v1421
        %v1424 = vmul.f32 %v1371, %v1421
        %v1425 = vadd.f32 %v1363, %v1422
        %v1426 = vadd.f32 %v1364, %v1423
        %v1427 = vadd.f32 %v1365, %v1424
        %s1428 = scalar_lea.vmem %s223, 72
        %v1429 = vld [vmem:[%s1428] sm:$0xff]
        %v1430 = vld [vmem:[%s1428 + $0x8] sm:$0xff]
        %v1431 = vld [vmem:[%s1428 + $0x10] sm:$0xf]
        %v1432 = vmul.f32 %v1429, 0.5
        %v1433 = vmul.f32 %v1430, 0.5
        %v1434 = vmul.f32 %v1431, 0.5
        %v1435 = vmul.f32 %v1429, -1.0
        %v1436 = vmul.f32 %v1430, -1.0
        %v1437 = vmul.f32 %v1431, -1.0
        %1441 = vrot.lane.b32.xlu0 %v1435, 127
        %v1442 = vpop.permute.xlu0 %1441
        %1443 = vrot.lane.b32.xlu0 %v1436, 127
        %v1444 = vpop.permute.xlu0 %1443
        %1445 = vrot.lane.b32.xlu0 %v1437, 127
        %v1446 = vpop.permute.xlu0 %1445
        %v1450 = vadd.f32 %v1432, %v1442
        %v1451 = vadd.f32 %v1433, %v1444
        %v1452 = vadd.f32 %v1434, %v1446
        %1456 = vrot.lane.b32.xlu0 %v1432, 126
        %v1457 = vpop.permute.xlu0 %1456
        %1458 = vrot.lane.b32.xlu0 %v1433, 126
        %v1459 = vpop.permute.xlu0 %1458
        %1460 = vrot.lane.b32.xlu0 %v1434, 126
        %v1461 = vpop.permute.xlu0 %1460
        %v1465 = vadd.f32 %v1450, %v1457
        %v1466 = vadd.f32 %v1451, %v1459
        %v1467 = vadd.f32 %v1452, %v1461
        %v1468 = vmax.f32 %v1465, -3.0
        %v1469 = vmax.f32 %v1466, -3.0
        %v1470 = vmax.f32 %v1467, -3.0
        %v1471 = vmin.f32 %v1468, 3.0
        %v1472 = vmin.f32 %v1469, 3.0
        %v1473 = vmin.f32 %v1470, 3.0
        %v1474 = vstv %s230
        %v1475 = vmul.f32 %v1471, %v1474
        %v1476 = vmul.f32 %v1472, %v1474
        %v1477 = vmul.f32 %v1473, %v1474
        %v1478 = vadd.f32 %v1376, %v1475
        %v1479 = vadd.f32 %v1377, %v1476
        %v1480 = vadd.f32 %v1378, %v1477
        %v1481 = vstv %s236
        %v1482 = vmul.f32 %v1471, %v1481
        %v1483 = vmul.f32 %v1472, %v1481
        %v1484 = vmul.f32 %v1473, %v1481
        %v1485 = vadd.f32 %v1383, %v1482
        %v1486 = vadd.f32 %v1384, %v1483
        %v1487 = vadd.f32 %v1385, %v1484
        %v1488 = vstv %s242
        %v1489 = vmul.f32 %v1471, %v1488
        %v1490 = vmul.f32 %v1472, %v1488
        %v1491 = vmul.f32 %v1473, %v1488
        %v1492 = vadd.f32 %v1390, %v1489
        %v1493 = vadd.f32 %v1391, %v1490
        %v1494 = vadd.f32 %v1392, %v1491
        %v1495 = vstv %s248
        %v1496 = vmul.f32 %v1471, %v1495
        %v1497 = vmul.f32 %v1472, %v1495
        %v1498 = vmul.f32 %v1473, %v1495
        %v1499 = vadd.f32 %v1397, %v1496
        %v1500 = vadd.f32 %v1398, %v1497
        %v1501 = vadd.f32 %v1399, %v1498
        %v1502 = vstv %s254
        %v1503 = vmul.f32 %v1471, %v1502
        %v1504 = vmul.f32 %v1472, %v1502
        %v1505 = vmul.f32 %v1473, %v1502
        %v1506 = vadd.f32 %v1404, %v1503
        %v1507 = vadd.f32 %v1405, %v1504
        %v1508 = vadd.f32 %v1406, %v1505
        %v1509 = vstv %s260
        %v1510 = vmul.f32 %v1471, %v1509
        %v1511 = vmul.f32 %v1472, %v1509
        %v1512 = vmul.f32 %v1473, %v1509
        %v1513 = vadd.f32 %v1411, %v1510
        %v1514 = vadd.f32 %v1412, %v1511
        %v1515 = vadd.f32 %v1413, %v1512
        %v1516 = vstv %s266
        %v1517 = vmul.f32 %v1471, %v1516
        %v1518 = vmul.f32 %v1472, %v1516
        %v1519 = vmul.f32 %v1473, %v1516
        %v1520 = vadd.f32 %v1418, %v1517
        %v1521 = vadd.f32 %v1419, %v1518
        %v1522 = vadd.f32 %v1420, %v1519
        %v1523 = vstv %s272
        %v1524 = vmul.f32 %v1471, %v1523
        %v1525 = vmul.f32 %v1472, %v1523
        %v1526 = vmul.f32 %v1473, %v1523
        %v1527 = vadd.f32 %v1425, %v1524
        %v1528 = vadd.f32 %v1426, %v1525
        %v1529 = vadd.f32 %v1427, %v1526
        %v1530 = vmax.f32 %v1478, 0.0
        %v1531 = vmax.f32 %v1479, 0.0
        %v1532 = vmax.f32 %v1480, 0.0
        %1536 = vrot.lane.b32.xlu0 %v1530, 127
        %v1537 = vpop.permute.xlu0 %1536
        %1538 = vrot.lane.b32.xlu0 %v1531, 127
        %v1539 = vpop.permute.xlu0 %1538
        %1540 = vrot.lane.b32.xlu0 %v1532, 127
        %v1541 = vpop.permute.xlu0 %1540
        %vm1545 = vcmask 130050
        %1546 = vst.msk [vmem:[%s214 - $0x2] sm:$0xfc] %vm1545, %v1537
        %vm1547 = vcmask 130048
        %1548 = vst.msk [vmem:[%s214 + $0x6] sm:$0xff] %vm1547, %v1539
        %vm1549 = vcmask 123904
        %1550 = vst.msk [vmem:[%s214 + $0xe] sm:$0x3] %vm1549, %v1541
        %v1551 = vmax.f32 %v1485, 0.0
        %v1552 = vmax.f32 %v1486, 0.0
        %v1553 = vmax.f32 %v1487, 0.0
        %1557 = vrot.lane.b32.xlu0 %v1551, 127
        %v1558 = vpop.permute.xlu0 %1557
        %1559 = vrot.lane.b32.xlu0 %v1552, 127
        %v1560 = vpop.permute.xlu0 %1559
        %1561 = vrot.lane.b32.xlu0 %v1553, 127
        %v1562 = vpop.permute.xlu0 %1561
        %s1566 = scalar_lea.vmem %s214, 16 [#allocation7]
        %1567 = vst.msk [vmem:[%s1566 - $0x2] sm:$0xfc] %vm1545, %v1558
        %1568 = vst.msk [vmem:[%s1566 + $0x6] sm:$0xff] %vm1547, %v1560
        %1569 = vst.msk [vmem:[%s1566 + $0xe] sm:$0x3] %vm1549, %v1562
        %v1570 = vmax.f32 %v1492, 0.0
        %v1571 = vmax.f32 %v1493, 0.0
        %v1572 = vmax.f32 %v1494, 0.0
        %1576 = vrot.lane.b32.xlu0 %v1570, 127
        %v1577 = vpop.permute.xlu0 %1576
        %1578 = vrot.lane.b32.xlu0 %v1571, 127
        %v1579 = vpop.permute.xlu0 %1578
        %1580 = vrot.lane.b32.xlu0 %v1572, 127
        %v1581 = vpop.permute.xlu0 %1580
        %s1585 = scalar_lea.vmem %s214, 32 [#allocation7]
        %1586 = vst.msk [vmem:[%s1585 - $0x2] sm:$0xfc] %vm1545, %v1577
        %1587 = vst.msk [vmem:[%s1585 + $0x6] sm:$0xff] %vm1547, %v1579
        %1588 = vst.msk [vmem:[%s1585 + $0xe] sm:$0x3] %vm1549, %v1581
        %v1589 = vmax.f32 %v1499, 0.0
        %v1590 = vmax.f32 %v1500, 0.0
        %v1591 = vmax.f32 %v1501, 0.0
        %1595 = vrot.lane.b32.xlu0 %v1589, 127
        %v1596 = vpop.permute.xlu0 %1595
        %1597 = vrot.lane.b32.xlu0 %v1590, 127
        %v1598 = vpop.permute.xlu0 %1597
        %1599 = vrot.lane.b32.xlu0 %v1591, 127
        %v1600 = vpop.permute.xlu0 %1599
        %s1604 = scalar_lea.vmem %s214, 48 [#allocation7]
        %1605 = vst.msk [vmem:[%s1604 - $0x2] sm:$0xfc] %vm1545, %v1596
        %1606 = vst.msk [vmem:[%s1604 + $0x6] sm:$0xff] %vm1547, %v1598
        %1607 = vst.msk [vmem:[%s1604 + $0xe] sm:$0x3] %vm1549, %v1600
        %v1608 = vmax.f32 %v1506, 0.0
        %v1609 = vmax.f32 %v1507, 0.0
        %v1610 = vmax.f32 %v1508, 0.0
        %1614 = vrot.lane.b32.xlu0 %v1608, 127
        %v1615 = vpop.permute.xlu0 %1614
        %1616 = vrot.lane.b32.xlu0 %v1609, 127
        %v1617 = vpop.permute.xlu0 %1616
        %1618 = vrot.lane.b32.xlu0 %v1610, 127
        %v1619 = vpop.permute.xlu0 %1618
        %s1623 = scalar_lea.vmem %s214, 64 [#allocation7]
        %1624 = vst.msk [vmem:[%s1623 - $0x2] sm:$0xfc] %vm1545, %v1615
        %1625 = vst.msk [vmem:[%s1623 + $0x6] sm:$0xff] %vm1547, %v1617
        %1626 = vst.msk [vmem:[%s1623 + $0xe] sm:$0x3] %vm1549, %v1619
        %v1627 = vmax.f32 %v1513, 0.0
        %v1628 = vmax.f32 %v1514, 0.0
        %v1629 = vmax.f32 %v1515, 0.0
        %1633 = vrot.lane.b32.xlu0 %v1627, 127
        %v1634 = vpop.permute.xlu0 %1633
        %1635 = vrot.lane.b32.xlu0 %v1628, 127
        %v1636 = vpop.permute.xlu0 %1635
        %1637 = vrot.lane.b32.xlu0 %v1629, 127
        %v1638 = vpop.permute.xlu0 %1637
        %s1642 = scalar_lea.vmem %s214, 80 [#allocation7]
        %1643 = vst.msk [vmem:[%s1642 - $0x2] sm:$0xfc] %vm1545, %v1634
        %1644 = vst.msk [vmem:[%s1642 + $0x6] sm:$0xff] %vm1547, %v1636
        %1645 = vst.msk [vmem:[%s1642 + $0xe] sm:$0x3] %vm1549, %v1638
        %v1646 = vmax.f32 %v1520, 0.0
        %v1647 = vmax.f32 %v1521, 0.0
        %v1648 = vmax.f32 %v1522, 0.0
        %1652 = vrot.lane.b32.xlu0 %v1646, 127
        %v1653 = vpop.permute.xlu0 %1652
        %1654 = vrot.lane.b32.xlu0 %v1647, 127
        %v1655 = vpop.permute.xlu0 %1654
        %1656 = vrot.lane.b32.xlu0 %v1648, 127
        %v1657 = vpop.permute.xlu0 %1656
        %s1661 = scalar_lea.vmem %s214, 96 [#allocation7]
        %1662 = vst.msk [vmem:[%s1661 - $0x2] sm:$0xfc] %vm1545, %v1653
        %1663 = vst.msk [vmem:[%s1661 + $0x6] sm:$0xff] %vm1547, %v1655
        %1664 = vst.msk [vmem:[%s1661 + $0xe] sm:$0x3] %vm1549, %v1657
        %v1665 = vmax.f32 %v1527, 0.0
        %v1666 = vmax.f32 %v1528, 0.0
        %v1667 = vmax.f32 %v1529, 0.0
        %1671 = vrot.lane.b32.xlu0 %v1665, 127
        %v1672 = vpop.permute.xlu0 %1671
        %1673 = vrot.lane.b32.xlu0 %v1666, 127
        %v1674 = vpop.permute.xlu0 %1673
        %1675 = vrot.lane.b32.xlu0 %v1667, 127
        %v1676 = vpop.permute.xlu0 %1675
        %s1680 = scalar_lea.vmem %s214, 112 [#allocation7]
        %1681 = vst.msk [vmem:[%s1680 - $0x2] sm:$0xfc] %vm1545, %v1672
        %1682 = vst.msk [vmem:[%s1680 + $0x6] sm:$0xff] %vm1547, %v1674
        %1683 = vst.msk [vmem:[%s1680 + $0xe] sm:$0x3] %vm1549, %v1676
        %s1684 = sand.u32 %s111, 1
        %s1685 = scalar_lea.sflag [#allocation3], %s1684
        %s1686 = sand.u32 %s111, 1
        %s1687 = smul.addr %s1686, 128
        %s1688 = scalar_lea.vmem [#allocation7], %s1687
        // Predicated region
        $region41: #{tpu_custom_call.1} parent=31 // pred_check
          %p1689 = pneg %p121
        $region42: #{tpu_custom_call.1} parent=31 // pred_check_branch
          %1691 = sbr.rel (%p1689) target = $region44
        $region43: #{tpu_custom_call.1} parent=31 // pred_region
          %s1692 = smul.u32 2, %s24
          %s1694 = ssub.s32 2048, 2048
          %1695 = vsyncadd %s1685, %s1694
          %s1696 = smul.addr %s23, 16
          %s1697 = sadd.s32 %s1692, %s1696
          %s1698 = smul.addr %s1697, 128
          %s1699 = scalar_lea.hbm %s3, %s1698
          %s1700 = sshll.u32 %s1688, 4
          %s1701 = int_to_ptr.vmem [resolvable:$true] %s1700
          %1706 = dma.vmem_to_hbm [thread:$0]  %s1701, 2048, %s1699, %s1685, 128, 128, 8
        $region44: #{tpu_custom_call.1} parent=31 // pred_fallthru
          _
      $region32: #{tpu_custom_call.1} parent=5 // pred_fallthru
        _
      %p1707 = scmp.le.s32.totalorder 2, %s14
      // Predicated region
      $region45: #{tpu_custom_call.1} parent=5 // pred_check
        %p1708 = pneg %p1707
      $region46: #{tpu_custom_call.1} parent=5 // pred_check_branch
        %1710 = sbr.rel (%p1708) target = $region48
      $region47: #{tpu_custom_call.1} parent=5 // pred_region
        %s1711 = ssub.s32 %s14, 2
        // Predicated region
        $region49: #{tpu_custom_call.1} parent=47 // pred_check
          %p1712 = pneg %p127
        $region50: #{tpu_custom_call.1} parent=47 // pred_check_branch
          %1714 = sbr.rel (%p1712) target = $region52
        $region51: #{tpu_custom_call.1} parent=47 // pred_region
          %s1715 = sand.u32 %s112, 1
          %s1716 = scalar_lea.sflag [#allocation3], %s1715
          %s1717 = sand.u32 %s112, 1
          %s1718 = smul.addr %s1717, 128
          %s1719 = scalar_lea.vmem [#allocation7], %s1718
          %1720 = dma.done %s1716, 2048
        $region52: #{tpu_custom_call.1} parent=47 // pred_fallthru
          _
      $region48: #{tpu_custom_call.1} parent=5 // pred_fallthru
        _
    $region6: #{tpu_custom_call.1} parent=1 // loop_footer
      %s18 = sadd.s32 1, %s14
    $region7: #{tpu_custom_call.1} parent=1 // loop_footer_branch
      %13 = sbr.rel target = $region3
    $region8: #{tpu_custom_call.1} parent=1 // loop_exit
      _
    %1721 = vsyncpa [#allocation3], 1
    %s1722 = scalar_lea.sflag [#allocation3], 1
    %1723 = vsyncpa %s1722, 1
    %1724 = vsyncpa [#allocation4], 1
    %s1725 = scalar_lea.sflag [#allocation4], 1
    %1726 = vsyncpa %s1725, 1
    %1727 = vsyncpa [#allocation6], 1

</llo_original>
